<compile_context>
chip_gen: v5e
topology: v5e:2x2
jax: 0.10.0
libtpu: 0.0.40
codegen_flags: <defaults>
</compile_context>

<pallas_src>
import functools
import math

import jax
import jax.numpy as jnp
from jax.experimental import pallas as pl
from jax.experimental.pallas import tpu as pltpu  # noqa: F401  (TPU backend)


CFG = dict(vocab=100, hidden=32, layers=2, heads=2, intermediate=64,
           max_pos=16, type_vocab=2)
NUM_ACTION = 4    # action_cls_lyr: Linear(H, 4)
NUM_COMP = 5      # comp_cls_lyr:   Linear(H, 5)
CLS_PAD = 128     # lane-dense classifier output width

_H = CFG["hidden"]
_I = CFG["intermediate"]
_L = CFG["layers"]
_NH = CFG["heads"]
_HD = _H // _NH

# ---------------- packed constant-buffer layout (rows x 128 lanes, f32) ------
_ROW_EMB_G = 0
_ROW_EMB_B = 1
_ROW_LAYER0 = 2
_ROWS_PER_LAYER = 8
(_OFF_QKV_B, _OFF_AO_B, _OFF_AO_LN_G, _OFF_AO_LN_B,
 _OFF_I_B, _OFF_O_B, _OFF_O_LN_G, _OFF_O_LN_B) = range(8)
_ROW_CLS_B = _ROW_LAYER0 + _ROWS_PER_LAYER * _L      # 18: classifier bias (128)
_ROW_POOL_B = _ROW_CLS_B + 1                          # 19: [a_attn.b, c_attn.b] in lanes 0:2
_ROW_POOL_WT = 24                                     # 24..55: pool weights^T (H,2), 8-aligned
_ROW_CLS_W = _ROW_POOL_WT + _H                        # 56..119: stacked classifier W (2H,128)
_N_CONST_ROWS = _ROW_CLS_W + 2 * _H                   # 120


# ------------------------------ fused kernel --------------------------------

def _ln(x, g, b, eps):
    """LayerNorm over the last (lane) axis; x (rows, H), g/b (1, H)."""
    mean = jnp.mean(x, axis=-1, keepdims=True)
    xc = x - mean
    var = jnp.mean(xc * xc, axis=-1, keepdims=True)
    return xc * jax.lax.rsqrt(var + eps) * g + b


def _softmax_last(x):
    """Stable softmax over the last axis; reciprocal rides the EUP slot."""
    m = jnp.max(x, axis=-1, keepdims=True)
    e = jnp.exp(x - m)
    return e * pl.reciprocal(jnp.sum(e, axis=-1, keepdims=True), approx=True)


def _fused_forward_kernel(x_ref, mask_ref, const_ref, attn_w_ref, i_w_ref,
                          o_w_ref, out_ref, *, B, S, H, nh, L, eps):
    f32 = jnp.float32
    hd = H // nh
    h3 = 3 * H
    idim = i_w_ref.shape[-1]

    x = x_ref[...].astype(f32)                       # (B*S, H) summed embeddings
    mask = mask_ref[...].astype(f32)                 # (B, S) additive mask (0 / -1e4)
    c = const_ref[...]                               # (rows, 128) packed constants

    # Hoisted: JAX does not CSE broadcast_in_dim, so build it once.
    mask_b = mask[:, None, :]                        # (B, 1, S)

    def row(r):                                      # (1, H) static slice helper
        return c[r:r + 1, :H]

    # Embedding LayerNorm.
    x = _ln(x, row(_ROW_EMB_G), row(_ROW_EMB_B), eps)

    # ------------------------------ encoder ------------------------------
    for l in range(L):                               # static Python loop, L = 2
        r0 = _ROW_LAYER0 + _ROWS_PER_LAYER * l
        w = attn_w_ref[l]                            # (H, 4H) = [qkv_w | out_proj_w]

        # Fused QKV projection; 1/sqrt(hd) is folded into the Q columns at init.
        qkv = (jnp.dot(x, w[:, :h3], preferred_element_type=f32)
               + c[r0 + _OFF_QKV_B:r0 + _OFF_QKV_B + 1, :h3])
        q = qkv[:, 0 * H:1 * H].reshape(B, S, H)
        k = qkv[:, 1 * H:2 * H].reshape(B, S, H)
        v = qkv[:, 2 * H:3 * H].reshape(B, S, H)

        # Per-head attention (static loop, nh = 2); heads stay lane-contiguous,
        # so the output projection collapses into ONE (B*S,H)@(H,H) matmul.
        ctx_heads = []
        for h in range(nh):
            lo, hi = h * hd, (h + 1) * hd
            s = jnp.einsum("bqd,bkd->bqk", q[:, :, lo:hi], k[:, :, lo:hi],
                           preferred_element_type=f32)          # (B, S, S)
            p = _softmax_last(s + mask_b)
            ctx = jnp.einsum("bqk,bkd->bqd", p, v[:, :, lo:hi],
                             preferred_element_type=f32)        # (B, S, hd)
            ctx_heads.append(ctx.reshape(B * S, hd))
        ctx_full = jnp.concatenate(ctx_heads, axis=-1)          # (B*S, H)
        attn_out = (jnp.dot(ctx_full, w[:, h3:h3 + H], preferred_element_type=f32)
                    + row(r0 + _OFF_AO_B))
        x = _ln(attn_out + x, row(r0 + _OFF_AO_LN_G), row(r0 + _OFF_AO_LN_B), eps)

        # FFN.  TODO(synk): HF BERT default is exact erf-GELU; tanh approx is
        # used here (EUP path, ~1e-3 drift on synthetic weights).
        inter = (jnp.dot(x, i_w_ref[l], preferred_element_type=f32)
                 + c[r0 + _OFF_I_B:r0 + _OFF_I_B + 1, :idim])
        inter = jax.nn.gelu(inter, approximate=True)
        ffn = (jnp.dot(inter, o_w_ref[l], preferred_element_type=f32)
               + row(r0 + _OFF_O_B))
        x = _ln(ffn + x, row(r0 + _OFF_O_LN_G), row(r0 + _OFF_O_LN_B), eps)

    # -------------- MyModel7 pooling heads + fused classifier --------------
    x3 = x.reshape(B, S, H)                          # seq_emb
    pwT = c[_ROW_POOL_WT:_ROW_POOL_WT + H, 0:2]      # (H, 2)  [a_attn | c_attn]
    pb = c[_ROW_POOL_B:_ROW_POOL_B + 1, 0:2]         # (1, 2)

    # Both pooling scores in one matmul; softmax over the sequence axis for
    # both heads at once (mask broadcast is a single tiny op).
    scores = jnp.dot(x, pwT, preferred_element_type=f32) + pb   # (B*S, 2)
    scores = scores.reshape(B, S, 2) + mask[:, :, None]
    m = jnp.max(scores, axis=1, keepdims=True)
    e = jnp.exp(scores - m)
    wts = e * pl.reciprocal(jnp.sum(e, axis=1, keepdims=True), approx=True)  # (B,S,2)

    # Weighted MEAN over the sequence (torch: mul(seq_emb, softmax).mean(dim=1)).
    a_pool = jnp.sum(x3 * wts[:, :, 0:1], axis=1)                # (B, H)
    c_pool = jnp.sum(x3 * wts[:, :, 1:2], axis=1)                # (B, H)
    pooled = jnp.concatenate([a_pool, c_pool], axis=-1) * (1.0 / S)   # (B, 2H)

    # TODO(synk): Dropout(0.3) in both classifier heads is inference-inactive.
    cls_w = c[_ROW_CLS_W:_ROW_CLS_W + 2 * H, :]                  # (2H, 128) stacked
    logits = (jnp.dot(pooled, cls_w, preferred_element_type=f32)
              + c[_ROW_CLS_B:_ROW_CLS_B + 1, :])                 # (B, 128)
    out_ref[...] = logits.astype(out_ref.dtype)


# --------------------------- parameter creation ------------------------------

def init_params(key, cfg):
    std = 0.02
    H, I, L = cfg["hidden"], cfg["intermediate"], cfg["layers"]
    nh = cfg["heads"]
    hd = H // nh

    def nrm(k, shape):
        return std * jax.random.normal(k, shape, dtype=jnp.float32)

    ks = iter(jax.random.split(key, 16))

    word_emb = nrm(next(ks), (cfg["vocab"], H))
    pos_emb = nrm(next(ks), (cfg["max_pos"], H))
    type_emb = nrm(next(ks), (cfg["type_vocab"], H))

    # Per-layer [qkv_w | out_proj_w] packed along lanes (H, 4H = 128);
    # attention scale 1/sqrt(hd) folded into the Q columns at init time.
    qkv_w = nrm(next(ks), (L, H, 3 * H))
    qkv_w = qkv_w.at[:, :, :H].multiply(1.0 / math.sqrt(hd))
    ao_w = nrm(next(ks), (L, H, H))
    attn_w = jnp.concatenate([qkv_w, ao_w], axis=-1)             # (L, H, 4H)

    i_w = nrm(next(ks), (L, H, I))
    o_w = nrm(next(ks), (L, I, H))

    pool_w = nrm(next(ks), (2, H))                               # rows: a_attn, c_attn
    a_w = nrm(next(ks), (H, NUM_ACTION))
    c_w = nrm(next(ks), (H, NUM_COMP))

    # One packed lane-dense constant buffer: LN gammas/betas, all biases,
    # pool weights (pre-transposed), stacked lane-padded classifier weights.
    # (Biases are zero / LN gammas one, matching fresh init; for a real
    #  checkpoint the Q part of qkv_b would also carry the folded 1/sqrt(hd).)
    const = jnp.zeros((_N_CONST_ROWS, CLS_PAD), jnp.float32)
    const = const.at[_ROW_EMB_G, :H].set(1.0)
    for l in range(L):
        r0 = _ROW_LAYER0 + _ROWS_PER_LAYER * l
        const = const.at[r0 + _OFF_AO_LN_G, :H].set(1.0)
        const = const.at[r0 + _OFF_O_LN_G, :H].set(1.0)
    const = const.at[_ROW_POOL_WT:_ROW_POOL_WT + H, 0:2].set(pool_w.T)
    const = const.at[_ROW_CLS_W:_ROW_CLS_W + H, :NUM_ACTION].set(a_w)
    const = const.at[_ROW_CLS_W + H:_ROW_CLS_W + 2 * H,
                     NUM_ACTION:NUM_ACTION + NUM_COMP].set(c_w)

    return dict(word_emb=word_emb, pos_emb=pos_emb, type_emb=type_emb,
                const=const, attn_w=attn_w, i_w=i_w, o_w=o_w)


# ------------------------------ model forward --------------------------------

def my_model7_forward(params, seq, attn_masks):
    """Returns (action_logits[B,4], comp_logits[B,5]) like MyModel7.forward."""
    B, S = seq.shape
    H, nh, L = CFG["hidden"], CFG["heads"], CFG["layers"]

    # Embedding gathers stay as XLA glue; everything else is ONE fused kernel.
    # token_type_ids default to 0 in the reference -> type_emb[0] everywhere.
    emb = (params["word_emb"][seq]
           + params["pos_emb"][jnp.arange(S)][None, :, :]
           + params["type_emb"][0][None, None, :])               # (B, S, H)
    x_emb = emb.reshape(B * S, H).astype(jnp.float32)
    add_mask = (1.0 - attn_masks.astype(jnp.float32)) * -10000.0  # (B, S)

    kernel = functools.partial(_fused_forward_kernel, B=B, S=S, H=H, nh=nh,
                               L=L, eps=1e-12)
    logits_pad = pl.pallas_call(
        kernel,
        out_shape=jax.ShapeDtypeStruct((B, CLS_PAD), jnp.float32),
    )(x_emb, add_mask, params["const"], params["attn_w"],
      params["i_w"], params["o_w"])

    return (logits_pad[:, :NUM_ACTION],
            logits_pad[:, NUM_ACTION:NUM_ACTION + NUM_COMP])


# ----------------------------------- main -------------------------------------

if __name__ == "__main__":
    key = jax.random.PRNGKey(0)
    k_par, k_ids = jax.random.split(key, 2)

    B, S = 2, 8
    params = init_params(k_par, CFG)

    seq = jax.random.randint(k_ids, (B, S), 0, CFG["vocab"], dtype=jnp.int32)
    # attention mask: ones with a padded tail on batch element 1
    attn_masks = jnp.ones((B, S), dtype=jnp.int32).at[1, 6:].set(0)

    fwd = jax.jit(my_model7_forward)
    out_a, out_c = fwd(params, seq, attn_masks)
    jax.block_until_ready((out_a, out_c))

    assert out_a.shape == (B, NUM_ACTION) and out_c.shape == (B, NUM_COMP)
    assert bool(jnp.all(jnp.isfinite(out_a))) and bool(jnp.all(jnp.isfinite(out_c)))
    print("KERNEL_OK")
</pallas_src>

<mosaic_0001>
module attributes {stable_mosaic.version = 11 : i64} {
  func.func @_fused_forward_kernel(%arg0: memref<16x32xf32, #tpu.memory_space<vmem>>, %arg1: memref<2x8xf32, #tpu.memory_space<vmem>>, %arg2: memref<120x128xf32, #tpu.memory_space<vmem>>, %arg3: memref<2x32x128xf32, #tpu.memory_space<vmem>>, %arg4: memref<2x32x64xf32, #tpu.memory_space<vmem>>, %arg5: memref<2x64x32xf32, #tpu.memory_space<vmem>>, %arg6: memref<2x128xf32, #tpu.memory_space<vmem>>) attributes {dimension_semantics = [], scalar_prefetch = 0 : i64, scratch_operands = 0 : i64, tpu.core_type = #tpu.core_type<tc>} {
    %c0 = arith.constant 0 : index
    %c0_0 = arith.constant 0 : index
    %0 = vector.load %arg0[%c0, %c0_0] : memref<16x32xf32, #tpu.memory_space<vmem>>, vector<16x32xf32>
    %c0_1 = arith.constant 0 : index
    %c0_2 = arith.constant 0 : index
    %1 = vector.load %arg1[%c0_1, %c0_2] : memref<2x8xf32, #tpu.memory_space<vmem>>, vector<2x8xf32>
    %c0_3 = arith.constant 0 : index
    %c0_4 = arith.constant 0 : index
    %2 = vector.load %arg2[%c0_3, %c0_4] : memref<120x128xf32, #tpu.memory_space<vmem>>, vector<120x128xf32>
    %3 = vector.shape_cast %1 : vector<2x8xf32> to vector<2x1x8xf32>
    %4 = vector.extract_strided_slice %2 {offsets = [0, 0], sizes = [1, 32], strides = [1, 1]} : vector<120x128xf32> to vector<1x32xf32>
    %5 = vector.extract_strided_slice %2 {offsets = [1, 0], sizes = [1, 32], strides = [1, 1]} : vector<120x128xf32> to vector<1x32xf32>
    %cst = arith.constant dense<0.000000e+00> : vector<16xf32>
    %6 = vector.multi_reduction <add>, %0, %cst [1] : vector<16x32xf32> to vector<16xf32>
    %7 = vector.shape_cast %6 : vector<16xf32> to vector<16x1xf32>
    %cst_5 = arith.constant 3.200000e+01 : f32
    %8 = vector.broadcast %cst_5 : f32 to vector<16x1xf32>
    %9 = arith.divf %7, %8 : vector<16x1xf32>
    %10 = vector.broadcast %9 : vector<16x1xf32> to vector<16x32xf32>
    %11 = arith.subf %0, %10 : vector<16x32xf32>
    %12 = arith.mulf %11, %11 : vector<16x32xf32>
    %cst_6 = arith.constant dense<0.000000e+00> : vector<16xf32>
    %13 = vector.multi_reduction <add>, %12, %cst_6 [1] : vector<16x32xf32> to vector<16xf32>
    %14 = vector.shape_cast %13 : vector<16xf32> to vector<16x1xf32>
    %cst_7 = arith.constant 3.200000e+01 : f32
    %15 = vector.broadcast %cst_7 : f32 to vector<16x1xf32>
    %16 = arith.divf %14, %15 : vector<16x1xf32>
    %cst_8 = arith.constant 9.99999996E-13 : f32
    %17 = vector.broadcast %cst_8 : f32 to vector<16x1xf32>
    %18 = arith.addf %16, %17 : vector<16x1xf32>
    %19 = math.rsqrt %18 : vector<16x1xf32>
    %20 = vector.broadcast %19 : vector<16x1xf32> to vector<16x32xf32>
    %21 = arith.mulf %11, %20 : vector<16x32xf32>
    %22 = vector.broadcast %4 : vector<1x32xf32> to vector<16x32xf32>
    %23 = arith.mulf %21, %22 : vector<16x32xf32>
    %24 = vector.broadcast %5 : vector<1x32xf32> to vector<16x32xf32>
    %25 = arith.addf %23, %24 : vector<16x32xf32>
    %c0_9 = arith.constant 0 : index
    %c0_10 = arith.constant 0 : index
    %c0_11 = arith.constant 0 : index
    %26 = vector.load %arg3[%c0_9, %c0_10, %c0_11] : memref<2x32x128xf32, #tpu.memory_space<vmem>>, vector<1x32x128xf32>
    %27 = vector.shape_cast %26 : vector<1x32x128xf32> to vector<32x128xf32>
    %28 = vector.extract_strided_slice %27 {offsets = [0, 0], sizes = [32, 96], strides = [1, 1]} : vector<32x128xf32> to vector<32x96xf32>
    %cst_12 = arith.constant dense<0.000000e+00> : vector<16x96xf32>
    %29 = tpu.matmul %25, %28, %cst_12 {dimension_numbers = #tpu.dot_dimension_numbers<[1], [0], [0], [1], [0, 0, 1, 1], [], []>} : vector<16x32xf32>, vector<32x96xf32>, vector<16x96xf32> -> vector<16x96xf32>
    %30 = vector.extract_strided_slice %2 {offsets = [2, 0], sizes = [1, 96], strides = [1, 1]} : vector<120x128xf32> to vector<1x96xf32>
    %31 = vector.broadcast %30 : vector<1x96xf32> to vector<16x96xf32>
    %32 = arith.addf %29, %31 : vector<16x96xf32>
    %33 = vector.extract_strided_slice %32 {offsets = [0, 0], sizes = [16, 32], strides = [1, 1]} : vector<16x96xf32> to vector<16x32xf32>
    %34 = vector.shape_cast %33 : vector<16x32xf32> to vector<2x8x32xf32>
    %35 = vector.extract_strided_slice %32 {offsets = [0, 32], sizes = [16, 32], strides = [1, 1]} : vector<16x96xf32> to vector<16x32xf32>
    %36 = vector.shape_cast %35 : vector<16x32xf32> to vector<2x8x32xf32>
    %37 = vector.extract_strided_slice %32 {offsets = [0, 64], sizes = [16, 32], strides = [1, 1]} : vector<16x96xf32> to vector<16x32xf32>
    %38 = vector.shape_cast %37 : vector<16x32xf32> to vector<2x8x32xf32>
    %39 = vector.extract_strided_slice %34 {offsets = [0, 0, 0], sizes = [2, 8, 16], strides = [1, 1, 1]} : vector<2x8x32xf32> to vector<2x8x16xf32>
    %40 = vector.extract_strided_slice %36 {offsets = [0, 0, 0], sizes = [2, 8, 16], strides = [1, 1, 1]} : vector<2x8x32xf32> to vector<2x8x16xf32>
    "tpu.trace_start"() <{level = 10 : i32, message = "bqd,bkd->bqk"}> : () -> ()
    %cst_13 = arith.constant dense<0.000000e+00> : vector<2x8x8xf32>
    %41 = tpu.matmul %39, %40, %cst_13 {dimension_numbers = #tpu.dot_dimension_numbers<[2], [2], [1], [1], [0, 0, 0, 1, 1, 1], [0], [0]>} : vector<2x8x16xf32>, vector<2x8x16xf32>, vector<2x8x8xf32> -> vector<2x8x8xf32>
    "tpu.trace_stop"() : () -> ()
    %42 = vector.broadcast %3 : vector<2x1x8xf32> to vector<2x8x8xf32>
    %43 = arith.addf %41, %42 : vector<2x8x8xf32>
    %cst_14 = arith.constant dense<0xFF800000> : vector<2x8xf32>
    %44 = vector.multi_reduction <maximumf>, %43, %cst_14 [2] : vector<2x8x8xf32> to vector<2x8xf32>
    %45 = vector.shape_cast %44 : vector<2x8xf32> to vector<2x8x1xf32>
    %46 = vector.broadcast %45 : vector<2x8x1xf32> to vector<2x8x8xf32>
    %47 = arith.subf %43, %46 : vector<2x8x8xf32>
    %48 = math.exp %47 : vector<2x8x8xf32>
    %cst_15 = arith.constant dense<0.000000e+00> : vector<2x8xf32>
    %49 = vector.multi_reduction <add>, %48, %cst_15 [2] : vector<2x8x8xf32> to vector<2x8xf32>
    %50 = vector.shape_cast %49 : vector<2x8xf32> to vector<2x8x1xf32>
    %51 = tpu.reciprocal %50 {approx = true} : vector<2x8x1xf32> -> vector<2x8x1xf32>
    %52 = vector.broadcast %51 : vector<2x8x1xf32> to vector<2x8x8xf32>
    %53 = arith.mulf %48, %52 : vector<2x8x8xf32>
    %54 = vector.extract_strided_slice %38 {offsets = [0, 0, 0], sizes = [2, 8, 16], strides = [1, 1, 1]} : vector<2x8x32xf32> to vector<2x8x16xf32>
    "tpu.trace_start"() <{level = 10 : i32, message = "bqk,bkd->bqd"}> : () -> ()
    %cst_16 = arith.constant dense<0.000000e+00> : vector<2x8x16xf32>
    %55 = tpu.matmul %53, %54, %cst_16 {dimension_numbers = #tpu.dot_dimension_numbers<[2], [1], [1], [2], [0, 0, 0, 1, 1, 2], [0], [0]>} : vector<2x8x8xf32>, vector<2x8x16xf32>, vector<2x8x16xf32> -> vector<2x8x16xf32>
    "tpu.trace_stop"() : () -> ()
    %56 = vector.shape_cast %55 : vector<2x8x16xf32> to vector<16x16xf32>
    %57 = vector.extract_strided_slice %34 {offsets = [0, 0, 16], sizes = [2, 8, 16], strides = [1, 1, 1]} : vector<2x8x32xf32> to vector<2x8x16xf32>
    %58 = vector.extract_strided_slice %36 {offsets = [0, 0, 16], sizes = [2, 8, 16], strides = [1, 1, 1]} : vector<2x8x32xf32> to vector<2x8x16xf32>
    "tpu.trace_start"() <{level = 10 : i32, message = "bqd,bkd->bqk"}> : () -> ()
    %cst_17 = arith.constant dense<0.000000e+00> : vector<2x8x8xf32>
    %59 = tpu.matmul %57, %58, %cst_17 {dimension_numbers = #tpu.dot_dimension_numbers<[2], [2], [1], [1], [0, 0, 0, 1, 1, 1], [0], [0]>} : vector<2x8x16xf32>, vector<2x8x16xf32>, vector<2x8x8xf32> -> vector<2x8x8xf32>
    "tpu.trace_stop"() : () -> ()
    %60 = vector.broadcast %3 : vector<2x1x8xf32> to vector<2x8x8xf32>
    %61 = arith.addf %59, %60 : vector<2x8x8xf32>
    %cst_18 = arith.constant dense<0xFF800000> : vector<2x8xf32>
    %62 = vector.multi_reduction <maximumf>, %61, %cst_18 [2] : vector<2x8x8xf32> to vector<2x8xf32>
    %63 = vector.shape_cast %62 : vector<2x8xf32> to vector<2x8x1xf32>
    %64 = vector.broadcast %63 : vector<2x8x1xf32> to vector<2x8x8xf32>
    %65 = arith.subf %61, %64 : vector<2x8x8xf32>
    %66 = math.exp %65 : vector<2x8x8xf32>
    %cst_19 = arith.constant dense<0.000000e+00> : vector<2x8xf32>
    %67 = vector.multi_reduction <add>, %66, %cst_19 [2] : vector<2x8x8xf32> to vector<2x8xf32>
    %68 = vector.shape_cast %67 : vector<2x8xf32> to vector<2x8x1xf32>
    %69 = tpu.reciprocal %68 {approx = true} : vector<2x8x1xf32> -> vector<2x8x1xf32>
    %70 = vector.broadcast %69 : vector<2x8x1xf32> to vector<2x8x8xf32>
    %71 = arith.mulf %66, %70 : vector<2x8x8xf32>
    %72 = vector.extract_strided_slice %38 {offsets = [0, 0, 16], sizes = [2, 8, 16], strides = [1, 1, 1]} : vector<2x8x32xf32> to vector<2x8x16xf32>
    "tpu.trace_start"() <{level = 10 : i32, message = "bqk,bkd->bqd"}> : () -> ()
    %cst_20 = arith.constant dense<0.000000e+00> : vector<2x8x16xf32>
    %73 = tpu.matmul %71, %72, %cst_20 {dimension_numbers = #tpu.dot_dimension_numbers<[2], [1], [1], [2], [0, 0, 0, 1, 1, 2], [0], [0]>} : vector<2x8x8xf32>, vector<2x8x16xf32>, vector<2x8x16xf32> -> vector<2x8x16xf32>
    "tpu.trace_stop"() : () -> ()
    %74 = vector.shape_cast %73 : vector<2x8x16xf32> to vector<16x16xf32>
    %75 = tpu.concatenate %56, %74 in 1 : vector<16x16xf32>, vector<16x16xf32> -> vector<16x32xf32>
    %76 = vector.extract_strided_slice %27 {offsets = [0, 96], sizes = [32, 32], strides = [1, 1]} : vector<32x128xf32> to vector<32x32xf32>
    %cst_21 = arith.constant dense<0.000000e+00> : vector<16x32xf32>
    %77 = tpu.matmul %75, %76, %cst_21 {dimension_numbers = #tpu.dot_dimension_numbers<[1], [0], [0], [1], [0, 0, 1, 1], [], []>} : vector<16x32xf32>, vector<32x32xf32>, vector<16x32xf32> -> vector<16x32xf32>
    %78 = vector.extract_strided_slice %2 {offsets = [3, 0], sizes = [1, 32], strides = [1, 1]} : vector<120x128xf32> to vector<1x32xf32>
    %79 = vector.broadcast %78 : vector<1x32xf32> to vector<16x32xf32>
    %80 = arith.addf %77, %79 : vector<16x32xf32>
    %81 = arith.addf %80, %25 : vector<16x32xf32>
    %82 = vector.extract_strided_slice %2 {offsets = [4, 0], sizes = [1, 32], strides = [1, 1]} : vector<120x128xf32> to vector<1x32xf32>
    %83 = vector.extract_strided_slice %2 {offsets = [5, 0], sizes = [1, 32], strides = [1, 1]} : vector<120x128xf32> to vector<1x32xf32>
    %cst_22 = arith.constant dense<0.000000e+00> : vector<16xf32>
    %84 = vector.multi_reduction <add>, %81, %cst_22 [1] : vector<16x32xf32> to vector<16xf32>
    %85 = vector.shape_cast %84 : vector<16xf32> to vector<16x1xf32>
    %cst_23 = arith.constant 3.200000e+01 : f32
    %86 = vector.broadcast %cst_23 : f32 to vector<16x1xf32>
    %87 = arith.divf %85, %86 : vector<16x1xf32>
    %88 = vector.broadcast %87 : vector<16x1xf32> to vector<16x32xf32>
    %89 = arith.subf %81, %88 : vector<16x32xf32>
    %90 = arith.mulf %89, %89 : vector<16x32xf32>
    %cst_24 = arith.constant dense<0.000000e+00> : vector<16xf32>
    %91 = vector.multi_reduction <add>, %90, %cst_24 [1] : vector<16x32xf32> to vector<16xf32>
    %92 = vector.shape_cast %91 : vector<16xf32> to vector<16x1xf32>
    %cst_25 = arith.constant 3.200000e+01 : f32
    %93 = vector.broadcast %cst_25 : f32 to vector<16x1xf32>
    %94 = arith.divf %92, %93 : vector<16x1xf32>
    %cst_26 = arith.constant 9.99999996E-13 : f32
    %95 = vector.broadcast %cst_26 : f32 to vector<16x1xf32>
    %96 = arith.addf %94, %95 : vector<16x1xf32>
    %97 = math.rsqrt %96 : vector<16x1xf32>
    %98 = vector.broadcast %97 : vector<16x1xf32> to vector<16x32xf32>
    %99 = arith.mulf %89, %98 : vector<16x32xf32>
    %100 = vector.broadcast %82 : vector<1x32xf32> to vector<16x32xf32>
    %101 = arith.mulf %99, %100 : vector<16x32xf32>
    %102 = vector.broadcast %83 : vector<1x32xf32> to vector<16x32xf32>
    %103 = arith.addf %101, %102 : vector<16x32xf32>
    %c0_27 = arith.constant 0 : index
    %c0_28 = arith.constant 0 : index
    %c0_29 = arith.constant 0 : index
    %104 = vector.load %arg4[%c0_27, %c0_28, %c0_29] : memref<2x32x64xf32, #tpu.memory_space<vmem>>, vector<1x32x64xf32>
    %105 = vector.shape_cast %104 : vector<1x32x64xf32> to vector<32x64xf32>
    %cst_30 = arith.constant dense<0.000000e+00> : vector<16x64xf32>
    %106 = tpu.matmul %103, %105, %cst_30 {dimension_numbers = #tpu.dot_dimension_numbers<[1], [0], [0], [1], [0, 0, 1, 1], [], []>} : vector<16x32xf32>, vector<32x64xf32>, vector<16x64xf32> -> vector<16x64xf32>
    %107 = vector.extract_strided_slice %2 {offsets = [6, 0], sizes = [1, 64], strides = [1, 1]} : vector<120x128xf32> to vector<1x64xf32>
    %108 = vector.broadcast %107 : vector<1x64xf32> to vector<16x64xf32>
    %109 = arith.addf %106, %108 : vector<16x64xf32>
    %110 = arith.mulf %109, %109 : vector<16x64xf32>
    %111 = arith.mulf %109, %110 : vector<16x64xf32>
    %cst_31 = arith.constant 4.471500e-02 : f32
    %112 = vector.broadcast %cst_31 : f32 to vector<16x64xf32>
    %113 = arith.mulf %112, %111 : vector<16x64xf32>
    %114 = arith.addf %109, %113 : vector<16x64xf32>
    %cst_32 = arith.constant 0.797884583 : f32
    %115 = vector.broadcast %cst_32 : f32 to vector<16x64xf32>
    %116 = arith.mulf %115, %114 : vector<16x64xf32>
    %117 = math.tanh %116 : vector<16x64xf32>
    %cst_33 = arith.constant 1.000000e+00 : f32
    %118 = vector.broadcast %cst_33 : f32 to vector<16x64xf32>
    %119 = arith.addf %118, %117 : vector<16x64xf32>
    %cst_34 = arith.constant 5.000000e-01 : f32
    %120 = vector.broadcast %cst_34 : f32 to vector<16x64xf32>
    %121 = arith.mulf %120, %119 : vector<16x64xf32>
    %122 = arith.mulf %109, %121 : vector<16x64xf32>
    %c0_35 = arith.constant 0 : index
    %c0_36 = arith.constant 0 : index
    %c0_37 = arith.constant 0 : index
    %123 = vector.load %arg5[%c0_35, %c0_36, %c0_37] : memref<2x64x32xf32, #tpu.memory_space<vmem>>, vector<1x64x32xf32>
    %124 = vector.shape_cast %123 : vector<1x64x32xf32> to vector<64x32xf32>
    %cst_38 = arith.constant dense<0.000000e+00> : vector<16x32xf32>
    %125 = tpu.matmul %122, %124, %cst_38 {dimension_numbers = #tpu.dot_dimension_numbers<[1], [0], [0], [1], [0, 0, 1, 1], [], []>} : vector<16x64xf32>, vector<64x32xf32>, vector<16x32xf32> -> vector<16x32xf32>
    %126 = vector.extract_strided_slice %2 {offsets = [7, 0], sizes = [1, 32], strides = [1, 1]} : vector<120x128xf32> to vector<1x32xf32>
    %127 = vector.broadcast %126 : vector<1x32xf32> to vector<16x32xf32>
    %128 = arith.addf %125, %127 : vector<16x32xf32>
    %129 = arith.addf %128, %103 : vector<16x32xf32>
    %130 = vector.extract_strided_slice %2 {offsets = [8, 0], sizes = [1, 32], strides = [1, 1]} : vector<120x128xf32> to vector<1x32xf32>
    %131 = vector.extract_strided_slice %2 {offsets = [9, 0], sizes = [1, 32], strides = [1, 1]} : vector<120x128xf32> to vector<1x32xf32>
    %cst_39 = arith.constant dense<0.000000e+00> : vector<16xf32>
    %132 = vector.multi_reduction <add>, %129, %cst_39 [1] : vector<16x32xf32> to vector<16xf32>
    %133 = vector.shape_cast %132 : vector<16xf32> to vector<16x1xf32>
    %cst_40 = arith.constant 3.200000e+01 : f32
    %134 = vector.broadcast %cst_40 : f32 to vector<16x1xf32>
    %135 = arith.divf %133, %134 : vector<16x1xf32>
    %136 = vector.broadcast %135 : vector<16x1xf32> to vector<16x32xf32>
    %137 = arith.subf %129, %136 : vector<16x32xf32>
    %138 = arith.mulf %137, %137 : vector<16x32xf32>
    %cst_41 = arith.constant dense<0.000000e+00> : vector<16xf32>
    %139 = vector.multi_reduction <add>, %138, %cst_41 [1] : vector<16x32xf32> to vector<16xf32>
    %140 = vector.shape_cast %139 : vector<16xf32> to vector<16x1xf32>
    %cst_42 = arith.constant 3.200000e+01 : f32
    %141 = vector.broadcast %cst_42 : f32 to vector<16x1xf32>
    %142 = arith.divf %140, %141 : vector<16x1xf32>
    %cst_43 = arith.constant 9.99999996E-13 : f32
    %143 = vector.broadcast %cst_43 : f32 to vector<16x1xf32>
    %144 = arith.addf %142, %143 : vector<16x1xf32>
    %145 = math.rsqrt %144 : vector<16x1xf32>
    %146 = vector.broadcast %145 : vector<16x1xf32> to vector<16x32xf32>
    %147 = arith.mulf %137, %146 : vector<16x32xf32>
    %148 = vector.broadcast %130 : vector<1x32xf32> to vector<16x32xf32>
    %149 = arith.mulf %147, %148 : vector<16x32xf32>
    %150 = vector.broadcast %131 : vector<1x32xf32> to vector<16x32xf32>
    %151 = arith.addf %149, %150 : vector<16x32xf32>
    %c1 = arith.constant 1 : index
    %c0_44 = arith.constant 0 : index
    %c0_45 = arith.constant 0 : index
    %152 = vector.load %arg3[%c1, %c0_44, %c0_45] : memref<2x32x128xf32, #tpu.memory_space<vmem>>, vector<1x32x128xf32>
    %153 = vector.shape_cast %152 : vector<1x32x128xf32> to vector<32x128xf32>
    %154 = vector.extract_strided_slice %153 {offsets = [0, 0], sizes = [32, 96], strides = [1, 1]} : vector<32x128xf32> to vector<32x96xf32>
    %cst_46 = arith.constant dense<0.000000e+00> : vector<16x96xf32>
    %155 = tpu.matmul %151, %154, %cst_46 {dimension_numbers = #tpu.dot_dimension_numbers<[1], [0], [0], [1], [0, 0, 1, 1], [], []>} : vector<16x32xf32>, vector<32x96xf32>, vector<16x96xf32> -> vector<16x96xf32>
    %156 = vector.extract_strided_slice %2 {offsets = [10, 0], sizes = [1, 96], strides = [1, 1]} : vector<120x128xf32> to vector<1x96xf32>
    %157 = vector.broadcast %156 : vector<1x96xf32> to vector<16x96xf32>
    %158 = arith.addf %155, %157 : vector<16x96xf32>
    %159 = vector.extract_strided_slice %158 {offsets = [0, 0], sizes = [16, 32], strides = [1, 1]} : vector<16x96xf32> to vector<16x32xf32>
    %160 = vector.shape_cast %159 : vector<16x32xf32> to vector<2x8x32xf32>
    %161 = vector.extract_strided_slice %158 {offsets = [0, 32], sizes = [16, 32], strides = [1, 1]} : vector<16x96xf32> to vector<16x32xf32>
    %162 = vector.shape_cast %161 : vector<16x32xf32> to vector<2x8x32xf32>
    %163 = vector.extract_strided_slice %158 {offsets = [0, 64], sizes = [16, 32], strides = [1, 1]} : vector<16x96xf32> to vector<16x32xf32>
    %164 = vector.shape_cast %163 : vector<16x32xf32> to vector<2x8x32xf32>
    %165 = vector.extract_strided_slice %160 {offsets = [0, 0, 0], sizes = [2, 8, 16], strides = [1, 1, 1]} : vector<2x8x32xf32> to vector<2x8x16xf32>
    %166 = vector.extract_strided_slice %162 {offsets = [0, 0, 0], sizes = [2, 8, 16], strides = [1, 1, 1]} : vector<2x8x32xf32> to vector<2x8x16xf32>
    "tpu.trace_start"() <{level = 10 : i32, message = "bqd,bkd->bqk"}> : () -> ()
    %cst_47 = arith.constant dense<0.000000e+00> : vector<2x8x8xf32>
    %167 = tpu.matmul %165, %166, %cst_47 {dimension_numbers = #tpu.dot_dimension_numbers<[2], [2], [1], [1], [0, 0, 0, 1, 1, 1], [0], [0]>} : vector<2x8x16xf32>, vector<2x8x16xf32>, vector<2x8x8xf32> -> vector<2x8x8xf32>
    "tpu.trace_stop"() : () -> ()
    %168 = vector.broadcast %3 : vector<2x1x8xf32> to vector<2x8x8xf32>
    %169 = arith.addf %167, %168 : vector<2x8x8xf32>
    %cst_48 = arith.constant dense<0xFF800000> : vector<2x8xf32>
    %170 = vector.multi_reduction <maximumf>, %169, %cst_48 [2] : vector<2x8x8xf32> to vector<2x8xf32>
    %171 = vector.shape_cast %170 : vector<2x8xf32> to vector<2x8x1xf32>
    %172 = vector.broadcast %171 : vector<2x8x1xf32> to vector<2x8x8xf32>
    %173 = arith.subf %169, %172 : vector<2x8x8xf32>
    %174 = math.exp %173 : vector<2x8x8xf32>
    %cst_49 = arith.constant dense<0.000000e+00> : vector<2x8xf32>
    %175 = vector.multi_reduction <add>, %174, %cst_49 [2] : vector<2x8x8xf32> to vector<2x8xf32>
    %176 = vector.shape_cast %175 : vector<2x8xf32> to vector<2x8x1xf32>
    %177 = tpu.reciprocal %176 {approx = true} : vector<2x8x1xf32> -> vector<2x8x1xf32>
    %178 = vector.broadcast %177 : vector<2x8x1xf32> to vector<2x8x8xf32>
    %179 = arith.mulf %174, %178 : vector<2x8x8xf32>
    %180 = vector.extract_strided_slice %164 {offsets = [0, 0, 0], sizes = [2, 8, 16], strides = [1, 1, 1]} : vector<2x8x32xf32> to vector<2x8x16xf32>
    "tpu.trace_start"() <{level = 10 : i32, message = "bqk,bkd->bqd"}> : () -> ()
    %cst_50 = arith.constant dense<0.000000e+00> : vector<2x8x16xf32>
    %181 = tpu.matmul %179, %180, %cst_50 {dimension_numbers = #tpu.dot_dimension_numbers<[2], [1], [1], [2], [0, 0, 0, 1, 1, 2], [0], [0]>} : vector<2x8x8xf32>, vector<2x8x16xf32>, vector<2x8x16xf32> -> vector<2x8x16xf32>
    "tpu.trace_stop"() : () -> ()
    %182 = vector.shape_cast %181 : vector<2x8x16xf32> to vector<16x16xf32>
    %183 = vector.extract_strided_slice %160 {offsets = [0, 0, 16], sizes = [2, 8, 16], strides = [1, 1, 1]} : vector<2x8x32xf32> to vector<2x8x16xf32>
    %184 = vector.extract_strided_slice %162 {offsets = [0, 0, 16], sizes = [2, 8, 16], strides = [1, 1, 1]} : vector<2x8x32xf32> to vector<2x8x16xf32>
    "tpu.trace_start"() <{level = 10 : i32, message = "bqd,bkd->bqk"}> : () -> ()
    %cst_51 = arith.constant dense<0.000000e+00> : vector<2x8x8xf32>
    %185 = tpu.matmul %183, %184, %cst_51 {dimension_numbers = #tpu.dot_dimension_numbers<[2], [2], [1], [1], [0, 0, 0, 1, 1, 1], [0], [0]>} : vector<2x8x16xf32>, vector<2x8x16xf32>, vector<2x8x8xf32> -> vector<2x8x8xf32>
    "tpu.trace_stop"() : () -> ()
    %186 = vector.broadcast %3 : vector<2x1x8xf32> to vector<2x8x8xf32>
    %187 = arith.addf %185, %186 : vector<2x8x8xf32>
    %cst_52 = arith.constant dense<0xFF800000> : vector<2x8xf32>
    %188 = vector.multi_reduction <maximumf>, %187, %cst_52 [2] : vector<2x8x8xf32> to vector<2x8xf32>
    %189 = vector.shape_cast %188 : vector<2x8xf32> to vector<2x8x1xf32>
    %190 = vector.broadcast %189 : vector<2x8x1xf32> to vector<2x8x8xf32>
    %191 = arith.subf %187, %190 : vector<2x8x8xf32>
    %192 = math.exp %191 : vector<2x8x8xf32>
    %cst_53 = arith.constant dense<0.000000e+00> : vector<2x8xf32>
    %193 = vector.multi_reduction <add>, %192, %cst_53 [2] : vector<2x8x8xf32> to vector<2x8xf32>
    %194 = vector.shape_cast %193 : vector<2x8xf32> to vector<2x8x1xf32>
    %195 = tpu.reciprocal %194 {approx = true} : vector<2x8x1xf32> -> vector<2x8x1xf32>
    %196 = vector.broadcast %195 : vector<2x8x1xf32> to vector<2x8x8xf32>
    %197 = arith.mulf %192, %196 : vector<2x8x8xf32>
    %198 = vector.extract_strided_slice %164 {offsets = [0, 0, 16], sizes = [2, 8, 16], strides = [1, 1, 1]} : vector<2x8x32xf32> to vector<2x8x16xf32>
    "tpu.trace_start"() <{level = 10 : i32, message = "bqk,bkd->bqd"}> : () -> ()
    %cst_54 = arith.constant dense<0.000000e+00> : vector<2x8x16xf32>
    %199 = tpu.matmul %197, %198, %cst_54 {dimension_numbers = #tpu.dot_dimension_numbers<[2], [1], [1], [2], [0, 0, 0, 1, 1, 2], [0], [0]>} : vector<2x8x8xf32>, vector<2x8x16xf32>, vector<2x8x16xf32> -> vector<2x8x16xf32>
    "tpu.trace_stop"() : () -> ()
    %200 = vector.shape_cast %199 : vector<2x8x16xf32> to vector<16x16xf32>
    %201 = tpu.concatenate %182, %200 in 1 : vector<16x16xf32>, vector<16x16xf32> -> vector<16x32xf32>
    %202 = vector.extract_strided_slice %153 {offsets = [0, 96], sizes = [32, 32], strides = [1, 1]} : vector<32x128xf32> to vector<32x32xf32>
    %cst_55 = arith.constant dense<0.000000e+00> : vector<16x32xf32>
    %203 = tpu.matmul %201, %202, %cst_55 {dimension_numbers = #tpu.dot_dimension_numbers<[1], [0], [0], [1], [0, 0, 1, 1], [], []>} : vector<16x32xf32>, vector<32x32xf32>, vector<16x32xf32> -> vector<16x32xf32>
    %204 = vector.extract_strided_slice %2 {offsets = [11, 0], sizes = [1, 32], strides = [1, 1]} : vector<120x128xf32> to vector<1x32xf32>
    %205 = vector.broadcast %204 : vector<1x32xf32> to vector<16x32xf32>
    %206 = arith.addf %203, %205 : vector<16x32xf32>
    %207 = arith.addf %206, %151 : vector<16x32xf32>
    %208 = vector.extract_strided_slice %2 {offsets = [12, 0], sizes = [1, 32], strides = [1, 1]} : vector<120x128xf32> to vector<1x32xf32>
    %209 = vector.extract_strided_slice %2 {offsets = [13, 0], sizes = [1, 32], strides = [1, 1]} : vector<120x128xf32> to vector<1x32xf32>
    %cst_56 = arith.constant dense<0.000000e+00> : vector<16xf32>
    %210 = vector.multi_reduction <add>, %207, %cst_56 [1] : vector<16x32xf32> to vector<16xf32>
    %211 = vector.shape_cast %210 : vector<16xf32> to vector<16x1xf32>
    %cst_57 = arith.constant 3.200000e+01 : f32
    %212 = vector.broadcast %cst_57 : f32 to vector<16x1xf32>
    %213 = arith.divf %211, %212 : vector<16x1xf32>
    %214 = vector.broadcast %213 : vector<16x1xf32> to vector<16x32xf32>
    %215 = arith.subf %207, %214 : vector<16x32xf32>
    %216 = arith.mulf %215, %215 : vector<16x32xf32>
    %cst_58 = arith.constant dense<0.000000e+00> : vector<16xf32>
    %217 = vector.multi_reduction <add>, %216, %cst_58 [1] : vector<16x32xf32> to vector<16xf32>
    %218 = vector.shape_cast %217 : vector<16xf32> to vector<16x1xf32>
    %cst_59 = arith.constant 3.200000e+01 : f32
    %219 = vector.broadcast %cst_59 : f32 to vector<16x1xf32>
    %220 = arith.divf %218, %219 : vector<16x1xf32>
    %cst_60 = arith.constant 9.99999996E-13 : f32
    %221 = vector.broadcast %cst_60 : f32 to vector<16x1xf32>
    %222 = arith.addf %220, %221 : vector<16x1xf32>
    %223 = math.rsqrt %222 : vector<16x1xf32>
    %224 = vector.broadcast %223 : vector<16x1xf32> to vector<16x32xf32>
    %225 = arith.mulf %215, %224 : vector<16x32xf32>
    %226 = vector.broadcast %208 : vector<1x32xf32> to vector<16x32xf32>
    %227 = arith.mulf %225, %226 : vector<16x32xf32>
    %228 = vector.broadcast %209 : vector<1x32xf32> to vector<16x32xf32>
    %229 = arith.addf %227, %228 : vector<16x32xf32>
    %c1_61 = arith.constant 1 : index
    %c0_62 = arith.constant 0 : index
    %c0_63 = arith.constant 0 : index
    %230 = vector.load %arg4[%c1_61, %c0_62, %c0_63] : memref<2x32x64xf32, #tpu.memory_space<vmem>>, vector<1x32x64xf32>
    %231 = vector.shape_cast %230 : vector<1x32x64xf32> to vector<32x64xf32>
    %cst_64 = arith.constant dense<0.000000e+00> : vector<16x64xf32>
    %232 = tpu.matmul %229, %231, %cst_64 {dimension_numbers = #tpu.dot_dimension_numbers<[1], [0], [0], [1], [0, 0, 1, 1], [], []>} : vector<16x32xf32>, vector<32x64xf32>, vector<16x64xf32> -> vector<16x64xf32>
    %233 = vector.extract_strided_slice %2 {offsets = [14, 0], sizes = [1, 64], strides = [1, 1]} : vector<120x128xf32> to vector<1x64xf32>
    %234 = vector.broadcast %233 : vector<1x64xf32> to vector<16x64xf32>
    %235 = arith.addf %232, %234 : vector<16x64xf32>
    %236 = arith.mulf %235, %235 : vector<16x64xf32>
    %237 = arith.mulf %235, %236 : vector<16x64xf32>
    %cst_65 = arith.constant 4.471500e-02 : f32
    %238 = vector.broadcast %cst_65 : f32 to vector<16x64xf32>
    %239 = arith.mulf %238, %237 : vector<16x64xf32>
    %240 = arith.addf %235, %239 : vector<16x64xf32>
    %cst_66 = arith.constant 0.797884583 : f32
    %241 = vector.broadcast %cst_66 : f32 to vector<16x64xf32>
    %242 = arith.mulf %241, %240 : vector<16x64xf32>
    %243 = math.tanh %242 : vector<16x64xf32>
    %cst_67 = arith.constant 1.000000e+00 : f32
    %244 = vector.broadcast %cst_67 : f32 to vector<16x64xf32>
    %245 = arith.addf %244, %243 : vector<16x64xf32>
    %cst_68 = arith.constant 5.000000e-01 : f32
    %246 = vector.broadcast %cst_68 : f32 to vector<16x64xf32>
    %247 = arith.mulf %246, %245 : vector<16x64xf32>
    %248 = arith.mulf %235, %247 : vector<16x64xf32>
    %c1_69 = arith.constant 1 : index
    %c0_70 = arith.constant 0 : index
    %c0_71 = arith.constant 0 : index
    %249 = vector.load %arg5[%c1_69, %c0_70, %c0_71] : memref<2x64x32xf32, #tpu.memory_space<vmem>>, vector<1x64x32xf32>
    %250 = vector.shape_cast %249 : vector<1x64x32xf32> to vector<64x32xf32>
    %cst_72 = arith.constant dense<0.000000e+00> : vector<16x32xf32>
    %251 = tpu.matmul %248, %250, %cst_72 {dimension_numbers = #tpu.dot_dimension_numbers<[1], [0], [0], [1], [0, 0, 1, 1], [], []>} : vector<16x64xf32>, vector<64x32xf32>, vector<16x32xf32> -> vector<16x32xf32>
    %252 = vector.extract_strided_slice %2 {offsets = [15, 0], sizes = [1, 32], strides = [1, 1]} : vector<120x128xf32> to vector<1x32xf32>
    %253 = vector.broadcast %252 : vector<1x32xf32> to vector<16x32xf32>
    %254 = arith.addf %251, %253 : vector<16x32xf32>
    %255 = arith.addf %254, %229 : vector<16x32xf32>
    %256 = vector.extract_strided_slice %2 {offsets = [16, 0], sizes = [1, 32], strides = [1, 1]} : vector<120x128xf32> to vector<1x32xf32>
    %257 = vector.extract_strided_slice %2 {offsets = [17, 0], sizes = [1, 32], strides = [1, 1]} : vector<120x128xf32> to vector<1x32xf32>
    %cst_73 = arith.constant dense<0.000000e+00> : vector<16xf32>
    %258 = vector.multi_reduction <add>, %255, %cst_73 [1] : vector<16x32xf32> to vector<16xf32>
    %259 = vector.shape_cast %258 : vector<16xf32> to vector<16x1xf32>
    %cst_74 = arith.constant 3.200000e+01 : f32
    %260 = vector.broadcast %cst_74 : f32 to vector<16x1xf32>
    %261 = arith.divf %259, %260 : vector<16x1xf32>
    %262 = vector.broadcast %261 : vector<16x1xf32> to vector<16x32xf32>
    %263 = arith.subf %255, %262 : vector<16x32xf32>
    %264 = arith.mulf %263, %263 : vector<16x32xf32>
    %cst_75 = arith.constant dense<0.000000e+00> : vector<16xf32>
    %265 = vector.multi_reduction <add>, %264, %cst_75 [1] : vector<16x32xf32> to vector<16xf32>
    %266 = vector.shape_cast %265 : vector<16xf32> to vector<16x1xf32>
    %cst_76 = arith.constant 3.200000e+01 : f32
    %267 = vector.broadcast %cst_76 : f32 to vector<16x1xf32>
    %268 = arith.divf %266, %267 : vector<16x1xf32>
    %cst_77 = arith.constant 9.99999996E-13 : f32
    %269 = vector.broadcast %cst_77 : f32 to vector<16x1xf32>
    %270 = arith.addf %268, %269 : vector<16x1xf32>
    %271 = math.rsqrt %270 : vector<16x1xf32>
    %272 = vector.broadcast %271 : vector<16x1xf32> to vector<16x32xf32>
    %273 = arith.mulf %263, %272 : vector<16x32xf32>
    %274 = vector.broadcast %256 : vector<1x32xf32> to vector<16x32xf32>
    %275 = arith.mulf %273, %274 : vector<16x32xf32>
    %276 = vector.broadcast %257 : vector<1x32xf32> to vector<16x32xf32>
    %277 = arith.addf %275, %276 : vector<16x32xf32>
    %278 = vector.shape_cast %277 : vector<16x32xf32> to vector<2x8x32xf32>
    %279 = vector.extract_strided_slice %2 {offsets = [24, 0], sizes = [32, 2], strides = [1, 1]} : vector<120x128xf32> to vector<32x2xf32>
    %280 = vector.extract_strided_slice %2 {offsets = [19, 0], sizes = [1, 2], strides = [1, 1]} : vector<120x128xf32> to vector<1x2xf32>
    %cst_78 = arith.constant dense<0.000000e+00> : vector<16x2xf32>
    %281 = tpu.matmul %277, %279, %cst_78 {dimension_numbers = #tpu.dot_dimension_numbers<[1], [0], [0], [1], [0, 0, 1, 1], [], []>} : vector<16x32xf32>, vector<32x2xf32>, vector<16x2xf32> -> vector<16x2xf32>
    %282 = vector.broadcast %280 : vector<1x2xf32> to vector<16x2xf32>
    %283 = arith.addf %281, %282 : vector<16x2xf32>
    %284 = vector.shape_cast %283 : vector<16x2xf32> to vector<2x8x2xf32>
    %285 = vector.shape_cast %1 : vector<2x8xf32> to vector<2x8x1xf32>
    %286 = vector.broadcast %285 : vector<2x8x1xf32> to vector<2x8x2xf32>
    %287 = arith.addf %284, %286 : vector<2x8x2xf32>
    %cst_79 = arith.constant dense<0xFF800000> : vector<2x2xf32>
    %288 = vector.multi_reduction <maximumf>, %287, %cst_79 [1] : vector<2x8x2xf32> to vector<2x2xf32>
    %289 = vector.shape_cast %288 : vector<2x2xf32> to vector<2x1x2xf32>
    %290 = vector.broadcast %289 : vector<2x1x2xf32> to vector<2x8x2xf32>
    %291 = arith.subf %287, %290 : vector<2x8x2xf32>
    %292 = math.exp %291 : vector<2x8x2xf32>
    %cst_80 = arith.constant dense<0.000000e+00> : vector<2x2xf32>
    %293 = vector.multi_reduction <add>, %292, %cst_80 [1] : vector<2x8x2xf32> to vector<2x2xf32>
    %294 = vector.shape_cast %293 : vector<2x2xf32> to vector<2x1x2xf32>
    %295 = tpu.reciprocal %294 {approx = true} : vector<2x1x2xf32> -> vector<2x1x2xf32>
    %296 = vector.broadcast %295 : vector<2x1x2xf32> to vector<2x8x2xf32>
    %297 = arith.mulf %292, %296 : vector<2x8x2xf32>
    %298 = vector.extract_strided_slice %297 {offsets = [0, 0, 0], sizes = [2, 8, 1], strides = [1, 1, 1]} : vector<2x8x2xf32> to vector<2x8x1xf32>
    %299 = vector.broadcast %298 : vector<2x8x1xf32> to vector<2x8x32xf32>
    %300 = arith.mulf %278, %299 : vector<2x8x32xf32>
    %cst_81 = arith.constant dense<0.000000e+00> : vector<2x32xf32>
    %301 = vector.multi_reduction <add>, %300, %cst_81 [1] : vector<2x8x32xf32> to vector<2x32xf32>
    %302 = vector.extract_strided_slice %297 {offsets = [0, 0, 1], sizes = [2, 8, 1], strides = [1, 1, 1]} : vector<2x8x2xf32> to vector<2x8x1xf32>
    %303 = vector.broadcast %302 : vector<2x8x1xf32> to vector<2x8x32xf32>
    %304 = arith.mulf %278, %303 : vector<2x8x32xf32>
    %cst_82 = arith.constant dense<0.000000e+00> : vector<2x32xf32>
    %305 = vector.multi_reduction <add>, %304, %cst_82 [1] : vector<2x8x32xf32> to vector<2x32xf32>
    %306 = tpu.concatenate %301, %305 in 1 : vector<2x32xf32>, vector<2x32xf32> -> vector<2x64xf32>
    %cst_83 = arith.constant 1.250000e-01 : f32
    %307 = vector.broadcast %cst_83 : f32 to vector<2x64xf32>
    %308 = arith.mulf %306, %307 : vector<2x64xf32>
    %309 = vector.extract_strided_slice %2 {offsets = [56, 0], sizes = [64, 128], strides = [1, 1]} : vector<120x128xf32> to vector<64x128xf32>
    %cst_84 = arith.constant dense<0.000000e+00> : vector<2x128xf32>
    %310 = tpu.matmul %308, %309, %cst_84 {dimension_numbers = #tpu.dot_dimension_numbers<[1], [0], [0], [1], [0, 0, 1, 1], [], []>} : vector<2x64xf32>, vector<64x128xf32>, vector<2x128xf32> -> vector<2x128xf32>
    %311 = vector.extract_strided_slice %2 {offsets = [18, 0], sizes = [1, 128], strides = [1, 1]} : vector<120x128xf32> to vector<1x128xf32>
    %312 = vector.broadcast %311 : vector<1x128xf32> to vector<2x128xf32>
    %313 = arith.addf %310, %312 : vector<2x128xf32>
    %c0_85 = arith.constant 0 : index
    %c0_86 = arith.constant 0 : index
    %314 = vector.load %arg6[%c0_85, %c0_86] : memref<2x128xf32, #tpu.memory_space<vmem>>, vector<2x128xf32>
    tpu.vector_store %arg6[%c0_85, %c0_86], %313 {strides = array<i32>} : memref<2x128xf32, #tpu.memory_space<vmem>>, vector<2x128xf32>,
    return
  }
}

</mosaic_0001>

<llo_original>
// kernel: my_model7_forward.1
$region0: #{my_model7_forward.1}
  #allocation0 [shape = 'u32[]', space=smem, size = 0x4, offset = 0x4, fixed_abs, tag = 'smem constant byte address 0x4 - core index']
  #allocation1 [shape = 'u32[72,128]{1,0:T(1,128)}', space=vmem, size = 0x9000, scoped, tag = 'internal scratch']
  %s0 = inlined_call_operand.vmem [shape: f32[16,32], index: 0, kind: input, shape index: {}]
  %s1 = inlined_call_operand.vmem [shape: f32[2,8], index: 1, kind: input, shape index: {}]
  %s2 = inlined_call_operand.vmem [shape: f32[120,128], index: 2, kind: input, shape index: {}]
  %s3 = inlined_call_operand.vmem [shape: f32[2,32,128], index: 3, kind: input, shape index: {}]
  %s4 = inlined_call_operand.vmem [shape: f32[2,32,64], index: 4, kind: input, shape index: {}]
  %s5 = inlined_call_operand.vmem [shape: f32[2,64,32], index: 5, kind: input, shape index: {}]
  %s6 = inlined_call_operand.vmem [shape: f32[2,128], index: 6, kind: output, shape index: {}]
  %s7 = sld [smem:[#allocation0]]
  $region34: #{my_model7_forward.1} parent=0
    _
  %s9 = ssub.s32 1, %s7
  %s10 = scalar_select 0, %s9, %s7
  // Predicated region
  $region2: #{my_model7_forward.1} parent=0 // pred_check
    _
  $region3: #{my_model7_forward.1} parent=0 // pred_check_branch
    %12 = sbr.rel (0) target = $region5
  $region4: #{my_model7_forward.1} parent=0 // pred_region
    _
  $region5: #{my_model7_forward.1} parent=0 // pred_fallthru
    _
  // Predicated region
  $region6: #{my_model7_forward.1} parent=0 // pred_check
    _
  $region7: #{my_model7_forward.1} parent=0 // pred_check_branch
    %14 = sbr.rel (0) target = $region9
  $region8: #{my_model7_forward.1} parent=0 // pred_region
    _
  $region9: #{my_model7_forward.1} parent=0 // pred_fallthru
    _
  // Predicated region
  $region10: #{my_model7_forward.1} parent=0 // pred_check
    _
  $region11: #{my_model7_forward.1} parent=0 // pred_check_branch
    %16 = sbr.rel (0) target = $region13
  $region12: #{my_model7_forward.1} parent=0 // pred_region
    _
  $region13: #{my_model7_forward.1} parent=0 // pred_fallthru
    _
  // Predicated region
  $region14: #{my_model7_forward.1} parent=0 // pred_check
    _
  $region15: #{my_model7_forward.1} parent=0 // pred_check_branch
    %18 = sbr.rel (0) target = $region17
  $region16: #{my_model7_forward.1} parent=0 // pred_region
    _
  $region17: #{my_model7_forward.1} parent=0 // pred_fallthru
    _
  // Predicated region
  $region18: #{my_model7_forward.1} parent=0 // pred_check
    _
  $region19: #{my_model7_forward.1} parent=0 // pred_check_branch
    %20 = sbr.rel (0) target = $region21
  $region20: #{my_model7_forward.1} parent=0 // pred_region
    _
  $region21: #{my_model7_forward.1} parent=0 // pred_fallthru
    _
  // Predicated region
  $region22: #{my_model7_forward.1} parent=0 // pred_check
    _
  $region23: #{my_model7_forward.1} parent=0 // pred_check_branch
    %22 = sbr.rel (0) target = $region25
  $region24: #{my_model7_forward.1} parent=0 // pred_region
    _
  $region25: #{my_model7_forward.1} parent=0 // pred_fallthru
    _
  %v23 = vld [vmem:[%s0] sm:$0xff]
  %v24 = vld [vmem:[%s0 + $0x8] sm:$0xff]
  %v25 = vld [vmem:[%s1] sm:$0x3]
  %v26 = vld [vmem:[%s2] sm:$0xff]
  %v27 = vld [vmem:[%s2 + $0x8] sm:$0xff]
  %v28 = vld [vmem:[%s2 + $0x10] sm:$0xff]
  %v29 = vld [vmem:[%s2 + $0x18] sm:$0xff]
  %v30 = vld [vmem:[%s2 + $0x20] sm:$0xff]
  %v31 = vld [vmem:[%s2 + $0x28] sm:$0xff]
  %v32 = vld [vmem:[%s2 + $0x30] sm:$0xff]
  %v33 = vld [vmem:[%s2 + $0x38] sm:$0xff]
  %v34 = vld [vmem:[%s2 + $0x40] sm:$0xff]
  %v35 = vld [vmem:[%s2 + $0x48] sm:$0xff]
  %v36 = vld [vmem:[%s2 + $0x50] sm:$0xff]
  %v37 = vld [vmem:[%s2 + $0x58] sm:$0xff]
  %v38 = vld [vmem:[%s2 + $0x60] sm:$0xff]
  %v39 = vld [vmem:[%s2 + $0x68] sm:$0xff]
  %v40 = vld [vmem:[%s2 + $0x70] sm:$0xff]
  %v42 = vrot.slane %v25, 1
  %vm43 = vcmask 261120
  %v44 = vsel %vm43, %v23, 0.0
  %45 = vadd.xlane.f32.xlu0 %v44
  %v46 = vpop.xlane.xlu0 %45
  %v47 = vsel %vm43, %v24, 0.0
  %48 = vadd.xlane.f32.xlu0 %v47
  %v49 = vpop.xlane.xlu0 %48
  %v50 = vrcp.pop 32.0
  %v51 = vmul.f32 32.0, %v50
  %v52 = vsub.f32 1.0, %v51
  %v53 = vmul.f32 %v50, %v52
  %v54 = vadd.f32 %v50, %v53
  %vm55 = vweird.f32 %v50
  %v56 = vsel %vm55, %v50, %v54
  %v57 = vmul.f32 %v46, %v56
  %v58 = vmul.f32 %v49, %v56
  %v59 = vsub.f32 %v23, %v57
  %v60 = vsub.f32 %v24, %v58
  %v61 = vmul.f32 %v59, %v59
  %v62 = vmul.f32 %v60, %v60
  %v63 = vsel %vm43, %v61, 0.0
  %64 = vadd.xlane.f32.xlu0 %v63
  %v65 = vpop.xlane.xlu0 %64
  %v66 = vsel %vm43, %v62, 0.0
  %67 = vadd.xlane.f32.xlu0 %v66
  %v68 = vpop.xlane.xlu0 %67
  %v69 = vmul.f32 %v65, %v56
  %v70 = vmul.f32 %v68, %v56
  %v71 = vadd.f32 %v69, 1e-12
  %v72 = vadd.f32 %v70, 1e-12
  %v73 = vrsqrt.pop %v71
  %v74 = vmul.f32 %v73, %v71
  %v75 = vmul.f32 %v74, %v73
  %v76 = vmul.f32 0.5, %v75
  %v77 = vsub.f32 1.5, %v76
  %v78 = vmul.f32 %v73, %v77
  %vm79 = vweird.f32 %v71
  %vm80 = vweird.f32 %v73
  %vm81 = vmor %vm79, %vm80
  %v82 = vsel %vm81, %v73, %v78
  %v83 = vrsqrt.pop %v72
  %v84 = vmul.f32 %v83, %v72
  %v85 = vmul.f32 %v84, %v83
  %v86 = vmul.f32 0.5, %v85
  %v87 = vsub.f32 1.5, %v86
  %v88 = vmul.f32 %v83, %v87
  %vm89 = vweird.f32 %v72
  %vm90 = vweird.f32 %v83
  %vm91 = vmor %vm89, %vm90
  %v92 = vsel %vm91, %v83, %v88
  %v93 = vmul.f32 %v59, %v82
  %v94 = vmul.f32 %v60, %v92
  %v95 = vperm.slane %v26, 0
  %v96 = vmul.f32 %v93, %v95
  %v97 = vmul.f32 %v94, %v95
  %v98 = vperm.slane %v26, 1
  %v99 = vadd.f32 %v96, %v98
  %v100 = vadd.f32 %v97, %v98
  %v101 = vld [vmem:[%s3] sm:$0xff]
  %v102 = vld [vmem:[%s3 + $0x8] sm:$0xff]
  %v103 = vld [vmem:[%s3 + $0x10] sm:$0xff]
  %v104 = vld [vmem:[%s3 + $0x18] sm:$0xff]
  %v105 = vperm.slane %v26, 2
  %v107 = vsel %vm43, %v99, 0
  %v110 = vsel %vm43, %v100, 0
  %112 = vmatpush.msra.mxu0 0.0
  %113 = vmatpush.msra.mxu0 0.0
  %114 = vmatpush.msra.mxu0 0.0
  %115 = vmatpush.msra.mxu0 0.0
  %116 = vmatpush.msra.mxu0 0.0
  %117 = vmatpush.msra.mxu0 0.0
  %118 = vmatpush.msra.mxu0 0.0
  %119 = vmatpush.msra.mxu0 0.0
  %120 = vmatpush.msra.mxu0 0.0
  %121 = vmatpush.msra.mxu0 0.0
  %122 = vmatpush.msra.mxu0 0.0
  %123 = vmatpush.msra.mxu0 0.0
  %124 = vmatpush.msra.mxu0 %v104
  %125 = vmatpush.msra.mxu0 %v103
  %126 = vmatpush.msra.mxu0 %v102
  %127 = vmatpush.msra.mxu0 %v101
  %128 = vmatmul.f32.gmra.mxu0 %v107
  %v129 = vpop.f32.mrf.mxu0
  %v130 = vadd.f32 %v105, %v129
  %131 = vmatmul.f32.gmra.mxu0 %v110
  %v132 = vpop.f32.mrf.mxu0
  %v133 = vadd.f32 %v105, %v132
  %134 = vdwg.mxu0
  %v135 = vperm.slane %v25, 0
  %v136 = vperm.slane %v42, 0
  %140 = vrot.lane.b32.xlu0 %v130, 96
  %v141 = vpop.permute.xlu0 %140
  %vm142 = vcmask 130048
  %v143 = vsel %vm142, %v130, 0
  %v145 = vsel %vm142, %v141, 0
  %147 = vmatpush.xpose.msra.mxu0 0.0
  %148 = vmatpush.xpose.msra.mxu0 0.0
  %149 = vmatpush.xpose.msra.mxu0 0.0
  %150 = vmatpush.xpose.msra.mxu0 0.0
  %151 = vmatpush.xpose.msra.mxu0 0.0
  %152 = vmatpush.xpose.msra.mxu0 0.0
  %153 = vmatpush.xpose.msra.mxu0 0.0
  %154 = vmatpush.xpose.msra.mxu0 0.0
  %155 = vmatpush.xpose.msra.mxu0 0.0
  %156 = vmatpush.xpose.msra.mxu0 0.0
  %157 = vmatpush.xpose.msra.mxu0 0.0
  %158 = vmatpush.xpose.msra.mxu0 0.0
  %159 = vmatpush.xpose.msra.mxu0 0.0
  %160 = vmatpush.xpose.msra.mxu0 0.0
  %161 = vmatpush.xpose.msra.mxu0 0.0
  %162 = vmatpush.xpose.msra.mxu0 %v145
  %163 = vmatmul.f32.gmra.mxu0 %v143
  %v164 = vpop.f32.mrf.mxu0
  %v165 = vadd.f32 %v135, %v164
  %166 = vdwg.mxu0
  %168 = vrot.lane.b32.xlu0 %v133, 96
  %v169 = vpop.permute.xlu0 %168
  %v170 = vsel %vm142, %v133, 0
  %v172 = vsel %vm142, %v169, 0
  %174 = vmatpush.xpose.msra.mxu0 0.0
  %175 = vmatpush.xpose.msra.mxu0 0.0
  %176 = vmatpush.xpose.msra.mxu0 0.0
  %177 = vmatpush.xpose.msra.mxu0 0.0
  %178 = vmatpush.xpose.msra.mxu0 0.0
  %179 = vmatpush.xpose.msra.mxu0 0.0
  %180 = vmatpush.xpose.msra.mxu0 0.0
  %181 = vmatpush.xpose.msra.mxu0 0.0
  %182 = vmatpush.xpose.msra.mxu0 0.0
  %183 = vmatpush.xpose.msra.mxu0 0.0
  %184 = vmatpush.xpose.msra.mxu0 0.0
  %185 = vmatpush.xpose.msra.mxu0 0.0
  %186 = vmatpush.xpose.msra.mxu0 0.0
  %187 = vmatpush.xpose.msra.mxu0 0.0
  %188 = vmatpush.xpose.msra.mxu0 0.0
  %189 = vmatpush.xpose.msra.mxu0 %v172
  %190 = vmatmul.f32.gmra.mxu0 %v170
  %v191 = vpop.f32.mrf.mxu0
  %v192 = vadd.f32 %v136, %v191
  %193 = vdwg.mxu0
  %vm194 = vcmask 64512
  %v195 = vsel %vm194, %v165, -inf
  %196 = vmax.xlane.f32.xlu0 %v195
  %v197 = vpop.xlane.xlu0 %196
  %v198 = vsel %vm194, %v192, -inf
  %199 = vmax.xlane.f32.xlu0 %v198
  %v200 = vpop.xlane.xlu0 %199
  %v201 = vsub.f32 %v165, %v197
  %v202 = vsub.f32 %v192, %v200
  %v203 = vmul.f32 %v201, 1.442695
  %v204 = vpow.pop %v203
  %v205 = vmul.f32 %v202, 1.442695
  %v206 = vpow.pop %v205
  %v207 = vsel %vm194, %v204, 0.0
  %208 = vadd.xlane.f32.xlu0 %v207
  %v209 = vpop.xlane.xlu0 %208
  %v210 = vsel %vm194, %v206, 0.0
  %211 = vadd.xlane.f32.xlu0 %v210
  %v212 = vpop.xlane.xlu0 %211
  %v213 = vrcp.pop %v209
  %v214 = vrcp.pop %v212
  %v215 = vmul.f32 %v204, %v213
  %v216 = vmul.f32 %v206, %v214
  %217 = vrot.lane.b32.xlu0 %v130, 64
  %v218 = vpop.permute.xlu0 %217
  %v221 = vsel %vm194, %v215, 0
  %223 = vmatpush.msra.mxu0 0.0
  %224 = vmatpush.msra.mxu0 0.0
  %225 = vmatpush.msra.mxu0 0.0
  %226 = vmatpush.msra.mxu0 0.0
  %227 = vmatpush.msra.mxu0 0.0
  %228 = vmatpush.msra.mxu0 0.0
  %229 = vmatpush.msra.mxu0 0.0
  %230 = vmatpush.msra.mxu0 0.0
  %231 = vmatpush.msra.mxu0 0.0
  %232 = vmatpush.msra.mxu0 0.0
  %233 = vmatpush.msra.mxu0 0.0
  %234 = vmatpush.msra.mxu0 0.0
  %235 = vmatpush.msra.mxu0 0.0
  %236 = vmatpush.msra.mxu0 0.0
  %237 = vmatpush.msra.mxu0 0.0
  %238 = vmatpush.msra.mxu0 %v218
  %239 = vmatmul.f32.gmra.mxu0 %v221
  %v240 = vpop.f32.mrf.mxu0
  %v241 = vadd.f32 0.0, %v240
  %242 = vdwg.mxu0
  %243 = vrot.lane.b32.xlu0 %v133, 64
  %v244 = vpop.permute.xlu0 %243
  %v247 = vsel %vm194, %v216, 0
  %249 = vmatpush.msra.mxu0 0.0
  %250 = vmatpush.msra.mxu0 0.0
  %251 = vmatpush.msra.mxu0 0.0
  %252 = vmatpush.msra.mxu0 0.0
  %253 = vmatpush.msra.mxu0 0.0
  %254 = vmatpush.msra.mxu0 0.0
  %255 = vmatpush.msra.mxu0 0.0
  %256 = vmatpush.msra.mxu0 0.0
  %257 = vmatpush.msra.mxu0 0.0
  %258 = vmatpush.msra.mxu0 0.0
  %259 = vmatpush.msra.mxu0 0.0
  %260 = vmatpush.msra.mxu0 0.0
  %261 = vmatpush.msra.mxu0 0.0
  %262 = vmatpush.msra.mxu0 0.0
  %263 = vmatpush.msra.mxu0 0.0
  %264 = vmatpush.msra.mxu0 %v244
  %265 = vmatmul.f32.gmra.mxu0 %v247
  %v266 = vpop.f32.mrf.mxu0
  %v267 = vadd.f32 0.0, %v266
  %268 = vdwg.mxu0
  %269 = vrot.lane.b32.xlu0 %v130, 112
  %v270 = vpop.permute.xlu0 %269
  %271 = vrot.lane.b32.xlu0 %v130, 80
  %v272 = vpop.permute.xlu0 %271
  %v273 = vsel %vm142, %v270, 0
  %v275 = vsel %vm142, %v272, 0
  %277 = vmatpush.xpose.msra.mxu0 0.0
  %278 = vmatpush.xpose.msra.mxu0 0.0
  %279 = vmatpush.xpose.msra.mxu0 0.0
  %280 = vmatpush.xpose.msra.mxu0 0.0
  %281 = vmatpush.xpose.msra.mxu0 0.0
  %282 = vmatpush.xpose.msra.mxu0 0.0
  %283 = vmatpush.xpose.msra.mxu0 0.0
  %284 = vmatpush.xpose.msra.mxu0 0.0
  %285 = vmatpush.xpose.msra.mxu0 0.0
  %286 = vmatpush.xpose.msra.mxu0 0.0
  %287 = vmatpush.xpose.msra.mxu0 0.0
  %288 = vmatpush.xpose.msra.mxu0 0.0
  %289 = vmatpush.xpose.msra.mxu0 0.0
  %290 = vmatpush.xpose.msra.mxu0 0.0
  %291 = vmatpush.xpose.msra.mxu0 0.0
  %292 = vmatpush.xpose.msra.mxu0 %v275
  %293 = vmatmul.f32.gmra.mxu0 %v273
  %v294 = vpop.f32.mrf.mxu0
  %v295 = vadd.f32 %v135, %v294
  %296 = vdwg.mxu0
  %297 = vrot.lane.b32.xlu0 %v133, 112
  %v298 = vpop.permute.xlu0 %297
  %299 = vrot.lane.b32.xlu0 %v133, 80
  %v300 = vpop.permute.xlu0 %299
  %v301 = vsel %vm142, %v298, 0
  %v303 = vsel %vm142, %v300, 0
  %305 = vmatpush.xpose.msra.mxu0 0.0
  %306 = vmatpush.xpose.msra.mxu0 0.0
  %307 = vmatpush.xpose.msra.mxu0 0.0
  %308 = vmatpush.xpose.msra.mxu0 0.0
  %309 = vmatpush.xpose.msra.mxu0 0.0
  %310 = vmatpush.xpose.msra.mxu0 0.0
  %311 = vmatpush.xpose.msra.mxu0 0.0
  %312 = vmatpush.xpose.msra.mxu0 0.0
  %313 = vmatpush.xpose.msra.mxu0 0.0
  %314 = vmatpush.xpose.msra.mxu0 0.0
  %315 = vmatpush.xpose.msra.mxu0 0.0
  %316 = vmatpush.xpose.msra.mxu0 0.0
  %317 = vmatpush.xpose.msra.mxu0 0.0
  %318 = vmatpush.xpose.msra.mxu0 0.0
  %319 = vmatpush.xpose.msra.mxu0 0.0
  %320 = vmatpush.xpose.msra.mxu0 %v303
  %321 = vmatmul.f32.gmra.mxu0 %v301
  %v322 = vpop.f32.mrf.mxu0
  %v323 = vadd.f32 %v136, %v322
  %324 = vdwg.mxu0
  %v325 = vsel %vm194, %v295, -inf
  %326 = vmax.xlane.f32.xlu0 %v325
  %v327 = vpop.xlane.xlu0 %326
  %v328 = vsel %vm194, %v323, -inf
  %329 = vmax.xlane.f32.xlu0 %v328
  %v330 = vpop.xlane.xlu0 %329
  %v331 = vsub.f32 %v295, %v327
  %v332 = vsub.f32 %v323, %v330
  %v333 = vmul.f32 %v331, 1.442695
  %v334 = vpow.pop %v333
  %v335 = vmul.f32 %v332, 1.442695
  %v336 = vpow.pop %v335
  %v337 = vsel %vm194, %v334, 0.0
  %338 = vadd.xlane.f32.xlu0 %v337
  %v339 = vpop.xlane.xlu0 %338
  %v340 = vsel %vm194, %v336, 0.0
  %341 = vadd.xlane.f32.xlu0 %v340
  %v342 = vpop.xlane.xlu0 %341
  %v343 = vrcp.pop %v339
  %v344 = vrcp.pop %v342
  %v345 = vmul.f32 %v334, %v343
  %v346 = vmul.f32 %v336, %v344
  %347 = vrot.lane.b32.xlu0 %v130, 48
  %v348 = vpop.permute.xlu0 %347
  %v351 = vsel %vm194, %v345, 0
  %353 = vmatpush.msra.mxu0 0.0
  %354 = vmatpush.msra.mxu0 0.0
  %355 = vmatpush.msra.mxu0 0.0
  %356 = vmatpush.msra.mxu0 0.0
  %357 = vmatpush.msra.mxu0 0.0
  %358 = vmatpush.msra.mxu0 0.0
  %359 = vmatpush.msra.mxu0 0.0
  %360 = vmatpush.msra.mxu0 0.0
  %361 = vmatpush.msra.mxu0 0.0
  %362 = vmatpush.msra.mxu0 0.0
  %363 = vmatpush.msra.mxu0 0.0
  %364 = vmatpush.msra.mxu0 0.0
  %365 = vmatpush.msra.mxu0 0.0
  %366 = vmatpush.msra.mxu0 0.0
  %367 = vmatpush.msra.mxu0 0.0
  %368 = vmatpush.msra.mxu0 %v348
  %369 = vmatmul.f32.gmra.mxu0 %v351
  %v370 = vpop.f32.mrf.mxu0
  %v371 = vadd.f32 0.0, %v370
  %372 = vdwg.mxu0
  %373 = vrot.lane.b32.xlu0 %v133, 48
  %v374 = vpop.permute.xlu0 %373
  %v377 = vsel %vm194, %v346, 0
  %379 = vmatpush.msra.mxu0 0.0
  %380 = vmatpush.msra.mxu0 0.0
  %381 = vmatpush.msra.mxu0 0.0
  %382 = vmatpush.msra.mxu0 0.0
  %383 = vmatpush.msra.mxu0 0.0
  %384 = vmatpush.msra.mxu0 0.0
  %385 = vmatpush.msra.mxu0 0.0
  %386 = vmatpush.msra.mxu0 0.0
  %387 = vmatpush.msra.mxu0 0.0
  %388 = vmatpush.msra.mxu0 0.0
  %389 = vmatpush.msra.mxu0 0.0
  %390 = vmatpush.msra.mxu0 0.0
  %391 = vmatpush.msra.mxu0 0.0
  %392 = vmatpush.msra.mxu0 0.0
  %393 = vmatpush.msra.mxu0 0.0
  %394 = vmatpush.msra.mxu0 %v374
  %395 = vmatmul.f32.gmra.mxu0 %v377
  %v396 = vpop.f32.mrf.mxu0
  %v397 = vadd.f32 0.0, %v396
  %398 = vdwg.mxu0
  %401 = vrot.lane.b32.xlu0 %v371, 16
  %v402 = vpop.permute.xlu0 %401
  %403 = vrot.lane.b32.xlu0 %v397, 16
  %v404 = vpop.permute.xlu0 %403
  %v407 = vsel %vm142, %v241, %v402
  %v408 = vsel %vm142, %v267, %v404
  %v409 = vperm.slane %v26, 3
  %414 = vrot.lane.b32.xlu0 %v101, 32
  %v415 = vpop.permute.xlu0 %414
  %416 = vrot.lane.b32.xlu0 %v102, 32
  %v417 = vpop.permute.xlu0 %416
  %418 = vrot.lane.b32.xlu0 %v103, 32
  %v419 = vpop.permute.xlu0 %418
  %420 = vrot.lane.b32.xlu0 %v104, 32
  %v421 = vpop.permute.xlu0 %420
  %v427 = vsel %vm43, %v407, 0
  %v430 = vsel %vm43, %v408, 0
  %432 = vmatpush.msra.mxu0 0.0
  %433 = vmatpush.msra.mxu0 0.0
  %434 = vmatpush.msra.mxu0 0.0
  %435 = vmatpush.msra.mxu0 0.0
  %436 = vmatpush.msra.mxu0 0.0
  %437 = vmatpush.msra.mxu0 0.0
  %438 = vmatpush.msra.mxu0 0.0
  %439 = vmatpush.msra.mxu0 0.0
  %440 = vmatpush.msra.mxu0 0.0
  %441 = vmatpush.msra.mxu0 0.0
  %442 = vmatpush.msra.mxu0 0.0
  %443 = vmatpush.msra.mxu0 0.0
  %444 = vmatpush.msra.mxu0 %v421
  %445 = vmatpush.msra.mxu0 %v419
  %446 = vmatpush.msra.mxu0 %v417
  %447 = vmatpush.msra.mxu0 %v415
  %448 = vmatmul.f32.gmra.mxu0 %v427
  %v449 = vpop.f32.mrf.mxu0
  %v450 = vadd.f32 %v409, %v449
  %451 = vmatmul.f32.gmra.mxu0 %v430
  %v452 = vpop.f32.mrf.mxu0
  %v453 = vadd.f32 %v409, %v452
  %454 = vdwg.mxu0
  %v455 = vadd.f32 %v450, %v99
  %v456 = vadd.f32 %v453, %v100
  %v457 = vsel %vm43, %v455, 0.0
  %458 = vadd.xlane.f32.xlu0 %v457
  %v459 = vpop.xlane.xlu0 %458
  %v460 = vsel %vm43, %v456, 0.0
  %461 = vadd.xlane.f32.xlu0 %v460
  %v462 = vpop.xlane.xlu0 %461
  %v463 = vmul.f32 %v459, %v56
  %v464 = vmul.f32 %v462, %v56
  %v465 = vsub.f32 %v455, %v463
  %v466 = vsub.f32 %v456, %v464
  %v467 = vmul.f32 %v465, %v465
  %v468 = vmul.f32 %v466, %v466
  %v469 = vsel %vm43, %v467, 0.0
  %470 = vadd.xlane.f32.xlu0 %v469
  %v471 = vpop.xlane.xlu0 %470
  %v472 = vsel %vm43, %v468, 0.0
  %473 = vadd.xlane.f32.xlu0 %v472
  %v474 = vpop.xlane.xlu0 %473
  %v475 = vmul.f32 %v471, %v56
  %v476 = vmul.f32 %v474, %v56
  %v477 = vadd.f32 %v475, 1e-12
  %v478 = vadd.f32 %v476, 1e-12
  %v479 = vrsqrt.pop %v477
  %v480 = vmul.f32 %v479, %v477
  %v481 = vmul.f32 %v480, %v479
  %v482 = vmul.f32 0.5, %v481
  %v483 = vsub.f32 1.5, %v482
  %v484 = vmul.f32 %v479, %v483
  %vm485 = vweird.f32 %v477
  %vm486 = vweird.f32 %v479
  %vm487 = vmor %vm485, %vm486
  %v488 = vsel %vm487, %v479, %v484
  %v489 = vrsqrt.pop %v478
  %v490 = vmul.f32 %v489, %v478
  %v491 = vmul.f32 %v490, %v489
  %v492 = vmul.f32 0.5, %v491
  %v493 = vsub.f32 1.5, %v492
  %v494 = vmul.f32 %v489, %v493
  %vm495 = vweird.f32 %v478
  %vm496 = vweird.f32 %v489
  %vm497 = vmor %vm495, %vm496
  %v498 = vsel %vm497, %v489, %v494
  %v499 = vmul.f32 %v465, %v488
  %v500 = vmul.f32 %v466, %v498
  %v501 = vperm.slane %v26, 4
  %v502 = vmul.f32 %v499, %v501
  %v503 = vmul.f32 %v500, %v501
  %v504 = vperm.slane %v26, 5
  %v505 = vadd.f32 %v502, %v504
  %v506 = vadd.f32 %v503, %v504
  %v507 = vld [vmem:[%s4] sm:$0xff]
  %v508 = vld [vmem:[%s4 + $0x8] sm:$0xff]
  %v509 = vld [vmem:[%s4 + $0x10] sm:$0xff]
  %v510 = vld [vmem:[%s4 + $0x18] sm:$0xff]
  %v511 = vperm.slane %v26, 6
  %v513 = vsel %vm43, %v505, 0
  %v516 = vsel %vm43, %v506, 0
  %518 = vmatpush.msra.mxu0 0.0
  %519 = vmatpush.msra.mxu0 0.0
  %520 = vmatpush.msra.mxu0 0.0
  %521 = vmatpush.msra.mxu0 0.0
  %522 = vmatpush.msra.mxu0 0.0
  %523 = vmatpush.msra.mxu0 0.0
  %524 = vmatpush.msra.mxu0 0.0
  %525 = vmatpush.msra.mxu0 0.0
  %526 = vmatpush.msra.mxu0 0.0
  %527 = vmatpush.msra.mxu0 0.0
  %528 = vmatpush.msra.mxu0 0.0
  %529 = vmatpush.msra.mxu0 0.0
  %530 = vmatpush.msra.mxu0 %v510
  %531 = vmatpush.msra.mxu0 %v509
  %532 = vmatpush.msra.mxu0 %v508
  %533 = vmatpush.msra.mxu0 %v507
  %534 = vmatmul.f32.gmra.mxu0 %v513
  %v535 = vpop.f32.mrf.mxu0
  %v536 = vadd.f32 %v511, %v535
  %537 = vmatmul.f32.gmra.mxu0 %v516
  %v538 = vpop.f32.mrf.mxu0
  %v539 = vadd.f32 %v511, %v538
  %540 = vdwg.mxu0
  %v541 = vmul.f32 %v536, %v536
  %v542 = vmul.f32 %v539, %v539
  %v543 = vmul.f32 %v536, %v541
  %v544 = vmul.f32 %v539, %v542
  %v545 = vmul.f32 %v543, 0.044715
  %v546 = vmul.f32 %v544, 0.044715
  %v547 = vadd.f32 %v536, %v545
  %v548 = vadd.f32 %v539, %v546
  %v549 = vmul.f32 %v547, 0.7978846
  %v550 = vmul.f32 %v548, 0.7978846
  %v551 = vtanh.pop %v549
  %v552 = vtanh.pop %v550
  %v553 = vadd.f32 %v551, 1.0
  %v554 = vadd.f32 %v552, 1.0
  %v555 = vmul.f32 %v553, 0.5
  %v556 = vmul.f32 %v554, 0.5
  %v557 = vmul.f32 %v536, %v555
  %v558 = vmul.f32 %v539, %v556
  %v559 = vld [vmem:[%s5] sm:$0xff]
  %v560 = vld [vmem:[%s5 + $0x8] sm:$0xff]
  %v561 = vld [vmem:[%s5 + $0x10] sm:$0xff]
  %v562 = vld [vmem:[%s5 + $0x18] sm:$0xff]
  %v563 = vld [vmem:[%s5 + $0x20] sm:$0xff]
  %v564 = vld [vmem:[%s5 + $0x28] sm:$0xff]
  %v565 = vld [vmem:[%s5 + $0x30] sm:$0xff]
  %v566 = vld [vmem:[%s5 + $0x38] sm:$0xff]
  %v567 = vperm.slane %v26, 7
  %vm568 = vcmask 523264
  %v570 = vsel %vm568, %v557, 0
  %v573 = vsel %vm568, %v558, 0
  %575 = vmatpush.msra.mxu0 0.0
  %576 = vmatpush.msra.mxu0 0.0
  %577 = vmatpush.msra.mxu0 0.0
  %578 = vmatpush.msra.mxu0 0.0
  %579 = vmatpush.msra.mxu0 0.0
  %580 = vmatpush.msra.mxu0 0.0
  %581 = vmatpush.msra.mxu0 0.0
  %582 = vmatpush.msra.mxu0 0.0
  %583 = vmatpush.msra.mxu0 %v566
  %584 = vmatpush.msra.mxu0 %v565
  %585 = vmatpush.msra.mxu0 %v564
  %586 = vmatpush.msra.mxu0 %v563
  %587 = vmatpush.msra.mxu0 %v562
  %588 = vmatpush.msra.mxu0 %v561
  %589 = vmatpush.msra.mxu0 %v560
  %590 = vmatpush.msra.mxu0 %v559
  %591 = vmatmul.f32.gmra.mxu0 %v570
  %v592 = vpop.f32.mrf.mxu0
  %v593 = vadd.f32 %v567, %v592
  %594 = vmatmul.f32.gmra.mxu0 %v573
  %v595 = vpop.f32.mrf.mxu0
  %v596 = vadd.f32 %v567, %v595
  %597 = vdwg.mxu0
  %v598 = vadd.f32 %v593, %v505
  %v599 = vadd.f32 %v596, %v506
  %v600 = vsel %vm43, %v598, 0.0
  %601 = vadd.xlane.f32.xlu0 %v600
  %v602 = vpop.xlane.xlu0 %601
  %v603 = vsel %vm43, %v599, 0.0
  %604 = vadd.xlane.f32.xlu0 %v603
  %v605 = vpop.xlane.xlu0 %604
  %v606 = vmul.f32 %v602, %v56
  %v607 = vmul.f32 %v605, %v56
  %v608 = vsub.f32 %v598, %v606
  %v609 = vsub.f32 %v599, %v607
  %v610 = vmul.f32 %v608, %v608
  %v611 = vmul.f32 %v609, %v609
  %v612 = vsel %vm43, %v610, 0.0
  %613 = vadd.xlane.f32.xlu0 %v612
  %v614 = vpop.xlane.xlu0 %613
  %v615 = vsel %vm43, %v611, 0.0
  %616 = vadd.xlane.f32.xlu0 %v615
  %v617 = vpop.xlane.xlu0 %616
  %v618 = vmul.f32 %v614, %v56
  %v619 = vmul.f32 %v617, %v56
  %v620 = vadd.f32 %v618, 1e-12
  %v621 = vadd.f32 %v619, 1e-12
  %v622 = vrsqrt.pop %v620
  %v623 = vmul.f32 %v622, %v620
  %v624 = vmul.f32 %v623, %v622
  %v625 = vmul.f32 0.5, %v624
  %v626 = vsub.f32 1.5, %v625
  %v627 = vmul.f32 %v622, %v626
  %vm628 = vweird.f32 %v620
  %vm629 = vweird.f32 %v622
  %vm630 = vmor %vm628, %vm629
  %v631 = vsel %vm630, %v622, %v627
  %v632 = vrsqrt.pop %v621
  %v633 = vmul.f32 %v632, %v621
  %v634 = vmul.f32 %v633, %v632
  %v635 = vmul.f32 0.5, %v634
  %v636 = vsub.f32 1.5, %v635
  %v637 = vmul.f32 %v632, %v636
  %vm638 = vweird.f32 %v621
  %vm639 = vweird.f32 %v632
  %vm640 = vmor %vm638, %vm639
  %v641 = vsel %vm640, %v632, %v637
  %v642 = vmul.f32 %v608, %v631
  %v643 = vmul.f32 %v609, %v641
  %v644 = vperm.slane %v27, 0
  %v645 = vmul.f32 %v642, %v644
  %v646 = vmul.f32 %v643, %v644
  %v647 = vperm.slane %v27, 1
  %v648 = vadd.f32 %v645, %v647
  %v649 = vadd.f32 %v646, %v647
  %s650 = scalar_lea.vmem %s3, 32
  %v651 = vld [vmem:[%s650] sm:$0xff]
  %v652 = vld [vmem:[%s650 + $0x8] sm:$0xff]
  %v653 = vld [vmem:[%s650 + $0x10] sm:$0xff]
  %v654 = vld [vmem:[%s650 + $0x18] sm:$0xff]
  %v655 = vperm.slane %v27, 2
  %v657 = vsel %vm43, %v648, 0
  %v660 = vsel %vm43, %v649, 0
  %662 = vmatpush.msra.mxu0 0.0
  %663 = vmatpush.msra.mxu0 0.0
  %664 = vmatpush.msra.mxu0 0.0
  %665 = vmatpush.msra.mxu0 0.0
  %666 = vmatpush.msra.mxu0 0.0
  %667 = vmatpush.msra.mxu0 0.0
  %668 = vmatpush.msra.mxu0 0.0
  %669 = vmatpush.msra.mxu0 0.0
  %670 = vmatpush.msra.mxu0 0.0
  %671 = vmatpush.msra.mxu0 0.0
  %672 = vmatpush.msra.mxu0 0.0
  %673 = vmatpush.msra.mxu0 0.0
  %674 = vmatpush.msra.mxu0 %v654
  %675 = vmatpush.msra.mxu0 %v653
  %676 = vmatpush.msra.mxu0 %v652
  %677 = vmatpush.msra.mxu0 %v651
  %678 = vmatmul.f32.gmra.mxu0 %v657
  %v679 = vpop.f32.mrf.mxu0
  %v680 = vadd.f32 %v655, %v679
  %681 = vmatmul.f32.gmra.mxu0 %v660
  %v682 = vpop.f32.mrf.mxu0
  %v683 = vadd.f32 %v655, %v682
  %684 = vdwg.mxu0
  %686 = vrot.lane.b32.xlu0 %v680, 96
  %v687 = vpop.permute.xlu0 %686
  %v688 = vsel %vm142, %v680, 0
  %v690 = vsel %vm142, %v687, 0
  %692 = vmatpush.xpose.msra.mxu0 0.0
  %693 = vmatpush.xpose.msra.mxu0 0.0
  %694 = vmatpush.xpose.msra.mxu0 0.0
  %695 = vmatpush.xpose.msra.mxu0 0.0
  %696 = vmatpush.xpose.msra.mxu0 0.0
  %697 = vmatpush.xpose.msra.mxu0 0.0
  %698 = vmatpush.xpose.msra.mxu0 0.0
  %699 = vmatpush.xpose.msra.mxu0 0.0
  %700 = vmatpush.xpose.msra.mxu0 0.0
  %701 = vmatpush.xpose.msra.mxu0 0.0
  %702 = vmatpush.xpose.msra.mxu0 0.0
  %703 = vmatpush.xpose.msra.mxu0 0.0
  %704 = vmatpush.xpose.msra.mxu0 0.0
  %705 = vmatpush.xpose.msra.mxu0 0.0
  %706 = vmatpush.xpose.msra.mxu0 0.0
  %707 = vmatpush.xpose.msra.mxu0 %v690
  %708 = vmatmul.f32.gmra.mxu0 %v688
  %v709 = vpop.f32.mrf.mxu0
  %v710 = vadd.f32 %v135, %v709
  %711 = vdwg.mxu0
  %713 = vrot.lane.b32.xlu0 %v683, 96
  %v714 = vpop.permute.xlu0 %713
  %v715 = vsel %vm142, %v683, 0
  %v717 = vsel %vm142, %v714, 0
  %719 = vmatpush.xpose.msra.mxu0 0.0
  %720 = vmatpush.xpose.msra.mxu0 0.0
  %721 = vmatpush.xpose.msra.mxu0 0.0
  %722 = vmatpush.xpose.msra.mxu0 0.0
  %723 = vmatpush.xpose.msra.mxu0 0.0
  %724 = vmatpush.xpose.msra.mxu0 0.0
  %725 = vmatpush.xpose.msra.mxu0 0.0
  %726 = vmatpush.xpose.msra.mxu0 0.0
  %727 = vmatpush.xpose.msra.mxu0 0.0
  %728 = vmatpush.xpose.msra.mxu0 0.0
  %729 = vmatpush.xpose.msra.mxu0 0.0
  %730 = vmatpush.xpose.msra.mxu0 0.0
  %731 = vmatpush.xpose.msra.mxu0 0.0
  %732 = vmatpush.xpose.msra.mxu0 0.0
  %733 = vmatpush.xpose.msra.mxu0 0.0
  %734 = vmatpush.xpose.msra.mxu0 %v717
  %735 = vmatmul.f32.gmra.mxu0 %v715
  %v736 = vpop.f32.mrf.mxu0
  %v737 = vadd.f32 %v136, %v736
  %738 = vdwg.mxu0
  %v739 = vsel %vm194, %v710, -inf
  %740 = vmax.xlane.f32.xlu0 %v739
  %v741 = vpop.xlane.xlu0 %740
  %v742 = vsel %vm194, %v737, -inf
  %743 = vmax.xlane.f32.xlu0 %v742
  %v744 = vpop.xlane.xlu0 %743
  %v745 = vsub.f32 %v710, %v741
  %v746 = vsub.f32 %v737, %v744
  %v747 = vmul.f32 %v745, 1.442695
  %v748 = vpow.pop %v747
  %v749 = vmul.f32 %v746, 1.442695
  %v750 = vpow.pop %v749
  %v751 = vsel %vm194, %v748, 0.0
  %752 = vadd.xlane.f32.xlu0 %v751
  %v753 = vpop.xlane.xlu0 %752
  %v754 = vsel %vm194, %v750, 0.0
  %755 = vadd.xlane.f32.xlu0 %v754
  %v756 = vpop.xlane.xlu0 %755
  %v757 = vrcp.pop %v753
  %v758 = vrcp.pop %v756
  %v759 = vmul.f32 %v748, %v757
  %v760 = vmul.f32 %v750, %v758
  %761 = vrot.lane.b32.xlu0 %v680, 64
  %v762 = vpop.permute.xlu0 %761
  %v765 = vsel %vm194, %v759, 0
  %767 = vmatpush.msra.mxu0 0.0
  %768 = vmatpush.msra.mxu0 0.0
  %769 = vmatpush.msra.mxu0 0.0
  %770 = vmatpush.msra.mxu0 0.0
  %771 = vmatpush.msra.mxu0 0.0
  %772 = vmatpush.msra.mxu0 0.0
  %773 = vmatpush.msra.mxu0 0.0
  %774 = vmatpush.msra.mxu0 0.0
  %775 = vmatpush.msra.mxu0 0.0
  %776 = vmatpush.msra.mxu0 0.0
  %777 = vmatpush.msra.mxu0 0.0
  %778 = vmatpush.msra.mxu0 0.0
  %779 = vmatpush.msra.mxu0 0.0
  %780 = vmatpush.msra.mxu0 0.0
  %781 = vmatpush.msra.mxu0 0.0
  %782 = vmatpush.msra.mxu0 %v762
  %783 = vmatmul.f32.gmra.mxu0 %v765
  %v784 = vpop.f32.mrf.mxu0
  %v785 = vadd.f32 0.0, %v784
  %786 = vdwg.mxu0
  %787 = vrot.lane.b32.xlu0 %v683, 64
  %v788 = vpop.permute.xlu0 %787
  %v791 = vsel %vm194, %v760, 0
  %793 = vmatpush.msra.mxu0 0.0
  %794 = vmatpush.msra.mxu0 0.0
  %795 = vmatpush.msra.mxu0 0.0
  %796 = vmatpush.msra.mxu0 0.0
  %797 = vmatpush.msra.mxu0 0.0
  %798 = vmatpush.msra.mxu0 0.0
  %799 = vmatpush.msra.mxu0 0.0
  %800 = vmatpush.msra.mxu0 0.0
  %801 = vmatpush.msra.mxu0 0.0
  %802 = vmatpush.msra.mxu0 0.0
  %803 = vmatpush.msra.mxu0 0.0
  %804 = vmatpush.msra.mxu0 0.0
  %805 = vmatpush.msra.mxu0 0.0
  %806 = vmatpush.msra.mxu0 0.0
  %807 = vmatpush.msra.mxu0 0.0
  %808 = vmatpush.msra.mxu0 %v788
  %809 = vmatmul.f32.gmra.mxu0 %v791
  %v810 = vpop.f32.mrf.mxu0
  %v811 = vadd.f32 0.0, %v810
  %812 = vdwg.mxu0
  %813 = vrot.lane.b32.xlu0 %v680, 112
  %v814 = vpop.permute.xlu0 %813
  %815 = vrot.lane.b32.xlu0 %v680, 80
  %v816 = vpop.permute.xlu0 %815
  %v817 = vsel %vm142, %v814, 0
  %v819 = vsel %vm142, %v816, 0
  %821 = vmatpush.xpose.msra.mxu0 0.0
  %822 = vmatpush.xpose.msra.mxu0 0.0
  %823 = vmatpush.xpose.msra.mxu0 0.0
  %824 = vmatpush.xpose.msra.mxu0 0.0
  %825 = vmatpush.xpose.msra.mxu0 0.0
  %826 = vmatpush.xpose.msra.mxu0 0.0
  %827 = vmatpush.xpose.msra.mxu0 0.0
  %828 = vmatpush.xpose.msra.mxu0 0.0
  %829 = vmatpush.xpose.msra.mxu0 0.0
  %830 = vmatpush.xpose.msra.mxu0 0.0
  %831 = vmatpush.xpose.msra.mxu0 0.0
  %832 = vmatpush.xpose.msra.mxu0 0.0
  %833 = vmatpush.xpose.msra.mxu0 0.0
  %834 = vmatpush.xpose.msra.mxu0 0.0
  %835 = vmatpush.xpose.msra.mxu0 0.0
  %836 = vmatpush.xpose.msra.mxu0 %v819
  %837 = vmatmul.f32.gmra.mxu0 %v817
  %v838 = vpop.f32.mrf.mxu0
  %v839 = vadd.f32 %v135, %v838
  %840 = vdwg.mxu0
  %841 = vrot.lane.b32.xlu0 %v683, 112
  %v842 = vpop.permute.xlu0 %841
  %843 = vrot.lane.b32.xlu0 %v683, 80
  %v844 = vpop.permute.xlu0 %843
  %v845 = vsel %vm142, %v842, 0
  %v847 = vsel %vm142, %v844, 0
  %849 = vmatpush.xpose.msra.mxu0 0.0
  %850 = vmatpush.xpose.msra.mxu0 0.0
  %851 = vmatpush.xpose.msra.mxu0 0.0
  %852 = vmatpush.xpose.msra.mxu0 0.0
  %853 = vmatpush.xpose.msra.mxu0 0.0
  %854 = vmatpush.xpose.msra.mxu0 0.0
  %855 = vmatpush.xpose.msra.mxu0 0.0
  %856 = vmatpush.xpose.msra.mxu0 0.0
  %857 = vmatpush.xpose.msra.mxu0 0.0
  %858 = vmatpush.xpose.msra.mxu0 0.0
  %859 = vmatpush.xpose.msra.mxu0 0.0
  %860 = vmatpush.xpose.msra.mxu0 0.0
  %861 = vmatpush.xpose.msra.mxu0 0.0
  %862 = vmatpush.xpose.msra.mxu0 0.0
  %863 = vmatpush.xpose.msra.mxu0 0.0
  %864 = vmatpush.xpose.msra.mxu0 %v847
  %865 = vmatmul.f32.gmra.mxu0 %v845
  %v866 = vpop.f32.mrf.mxu0
  %v867 = vadd.f32 %v136, %v866
  %868 = vdwg.mxu0
  %v869 = vsel %vm194, %v839, -inf
  %870 = vmax.xlane.f32.xlu0 %v869
  %v871 = vpop.xlane.xlu0 %870
  %v872 = vsel %vm194, %v867, -inf
  %873 = vmax.xlane.f32.xlu0 %v872
  %v874 = vpop.xlane.xlu0 %873
  %v875 = vsub.f32 %v839, %v871
  %v876 = vsub.f32 %v867, %v874
  %v877 = vmul.f32 %v875, 1.442695
  %v878 = vpow.pop %v877
  %v879 = vmul.f32 %v876, 1.442695
  %v880 = vpow.pop %v879
  %v881 = vsel %vm194, %v878, 0.0
  %882 = vadd.xlane.f32.xlu0 %v881
  %v883 = vpop.xlane.xlu0 %882
  %v884 = vsel %vm194, %v880, 0.0
  %885 = vadd.xlane.f32.xlu0 %v884
  %v886 = vpop.xlane.xlu0 %885
  %v887 = vrcp.pop %v883
  %v888 = vrcp.pop %v886
  %v889 = vmul.f32 %v878, %v887
  %v890 = vmul.f32 %v880, %v888
  %891 = vrot.lane.b32.xlu0 %v680, 48
  %v892 = vpop.permute.xlu0 %891
  %v895 = vsel %vm194, %v889, 0
  %897 = vmatpush.msra.mxu0 0.0
  %898 = vmatpush.msra.mxu0 0.0
  %899 = vmatpush.msra.mxu0 0.0
  %900 = vmatpush.msra.mxu0 0.0
  %901 = vmatpush.msra.mxu0 0.0
  %902 = vmatpush.msra.mxu0 0.0
  %903 = vmatpush.msra.mxu0 0.0
  %904 = vmatpush.msra.mxu0 0.0
  %905 = vmatpush.msra.mxu0 0.0
  %906 = vmatpush.msra.mxu0 0.0
  %907 = vmatpush.msra.mxu0 0.0
  %908 = vmatpush.msra.mxu0 0.0
  %909 = vmatpush.msra.mxu0 0.0
  %910 = vmatpush.msra.mxu0 0.0
  %911 = vmatpush.msra.mxu0 0.0
  %912 = vmatpush.msra.mxu0 %v892
  %913 = vmatmul.f32.gmra.mxu0 %v895
  %v914 = vpop.f32.mrf.mxu0
  %v915 = vadd.f32 0.0, %v914
  %916 = vdwg.mxu0
  %917 = vrot.lane.b32.xlu0 %v683, 48
  %v918 = vpop.permute.xlu0 %917
  %v921 = vsel %vm194, %v890, 0
  %923 = vmatpush.msra.mxu0 0.0
  %924 = vmatpush.msra.mxu0 0.0
  %925 = vmatpush.msra.mxu0 0.0
  %926 = vmatpush.msra.mxu0 0.0
  %927 = vmatpush.msra.mxu0 0.0
  %928 = vmatpush.msra.mxu0 0.0
  %929 = vmatpush.msra.mxu0 0.0
  %930 = vmatpush.msra.mxu0 0.0
  %931 = vmatpush.msra.mxu0 0.0
  %932 = vmatpush.msra.mxu0 0.0
  %933 = vmatpush.msra.mxu0 0.0
  %934 = vmatpush.msra.mxu0 0.0
  %935 = vmatpush.msra.mxu0 0.0
  %936 = vmatpush.msra.mxu0 0.0
  %937 = vmatpush.msra.mxu0 0.0
  %938 = vmatpush.msra.mxu0 %v918
  %939 = vmatmul.f32.gmra.mxu0 %v921
  %v940 = vpop.f32.mrf.mxu0
  %v941 = vadd.f32 0.0, %v940
  %942 = vdwg.mxu0
  %945 = vrot.lane.b32.xlu0 %v915, 16
  %v946 = vpop.permute.xlu0 %945
  %947 = vrot.lane.b32.xlu0 %v941, 16
  %v948 = vpop.permute.xlu0 %947
  %v951 = vsel %vm142, %v785, %v946
  %v952 = vsel %vm142, %v811, %v948
  %v953 = vperm.slane %v27, 3
  %958 = vrot.lane.b32.xlu0 %v651, 32
  %v959 = vpop.permute.xlu0 %958
  %960 = vrot.lane.b32.xlu0 %v652, 32
  %v961 = vpop.permute.xlu0 %960
  %962 = vrot.lane.b32.xlu0 %v653, 32
  %v963 = vpop.permute.xlu0 %962
  %964 = vrot.lane.b32.xlu0 %v654, 32
  %v965 = vpop.permute.xlu0 %964
  %v971 = vsel %vm43, %v951, 0
  %v974 = vsel %vm43, %v952, 0
  %976 = vmatpush.msra.mxu0 0.0
  %977 = vmatpush.msra.mxu0 0.0
  %978 = vmatpush.msra.mxu0 0.0
  %979 = vmatpush.msra.mxu0 0.0
  %980 = vmatpush.msra.mxu0 0.0
  %981 = vmatpush.msra.mxu0 0.0
  %982 = vmatpush.msra.mxu0 0.0
  %983 = vmatpush.msra.mxu0 0.0
  %984 = vmatpush.msra.mxu0 0.0
  %985 = vmatpush.msra.mxu0 0.0
  %986 = vmatpush.msra.mxu0 0.0
  %987 = vmatpush.msra.mxu0 0.0
  %988 = vmatpush.msra.mxu0 %v965
  %989 = vmatpush.msra.mxu0 %v963
  %990 = vmatpush.msra.mxu0 %v961
  %991 = vmatpush.msra.mxu0 %v959
  %992 = vmatmul.f32.gmra.mxu0 %v971
  %v993 = vpop.f32.mrf.mxu0
  %v994 = vadd.f32 %v953, %v993
  %995 = vmatmul.f32.gmra.mxu0 %v974
  %v996 = vpop.f32.mrf.mxu0
  %v997 = vadd.f32 %v953, %v996
  %998 = vdwg.mxu0
  %v999 = vadd.f32 %v994, %v648
  %v1000 = vadd.f32 %v997, %v649
  %v1001 = vsel %vm43, %v999, 0.0
  %1002 = vadd.xlane.f32.xlu0 %v1001
  %v1003 = vpop.xlane.xlu0 %1002
  %v1004 = vsel %vm43, %v1000, 0.0
  %1005 = vadd.xlane.f32.xlu0 %v1004
  %v1006 = vpop.xlane.xlu0 %1005
  %v1007 = vmul.f32 %v1003, %v56
  %v1008 = vmul.f32 %v1006, %v56
  %v1009 = vsub.f32 %v999, %v1007
  %v1010 = vsub.f32 %v1000, %v1008
  %v1011 = vmul.f32 %v1009, %v1009
  %v1012 = vmul.f32 %v1010, %v1010
  %v1013 = vsel %vm43, %v1011, 0.0
  %1014 = vadd.xlane.f32.xlu0 %v1013
  %v1015 = vpop.xlane.xlu0 %1014
  %v1016 = vsel %vm43, %v1012, 0.0
  %1017 = vadd.xlane.f32.xlu0 %v1016
  %v1018 = vpop.xlane.xlu0 %1017
  %v1019 = vmul.f32 %v1015, %v56
  %v1020 = vmul.f32 %v1018, %v56
  %v1021 = vadd.f32 %v1019, 1e-12
  %v1022 = vadd.f32 %v1020, 1e-12
  %v1023 = vrsqrt.pop %v1021
  %v1024 = vmul.f32 %v1023, %v1021
  %v1025 = vmul.f32 %v1024, %v1023
  %v1026 = vmul.f32 0.5, %v1025
  %v1027 = vsub.f32 1.5, %v1026
  %v1028 = vmul.f32 %v1023, %v1027
  %vm1029 = vweird.f32 %v1021
  %vm1030 = vweird.f32 %v1023
  %vm1031 = vmor %vm1029, %vm1030
  %v1032 = vsel %vm1031, %v1023, %v1028
  %v1033 = vrsqrt.pop %v1022
  %v1034 = vmul.f32 %v1033, %v1022
  %v1035 = vmul.f32 %v1034, %v1033
  %v1036 = vmul.f32 0.5, %v1035
  %v1037 = vsub.f32 1.5, %v1036
  %v1038 = vmul.f32 %v1033, %v1037
  %vm1039 = vweird.f32 %v1022
  %vm1040 = vweird.f32 %v1033
  %vm1041 = vmor %vm1039, %vm1040
  %v1042 = vsel %vm1041, %v1033, %v1038
  %v1043 = vmul.f32 %v1009, %v1032
  %v1044 = vmul.f32 %v1010, %v1042
  %v1045 = vperm.slane %v27, 4
  %v1046 = vmul.f32 %v1043, %v1045
  %v1047 = vmul.f32 %v1044, %v1045
  %v1048 = vperm.slane %v27, 5
  %v1049 = vadd.f32 %v1046, %v1048
  %v1050 = vadd.f32 %v1047, %v1048
  %s1051 = scalar_lea.vmem %s4, 32
  %v1052 = vld [vmem:[%s1051] sm:$0xff]
  %v1053 = vld [vmem:[%s1051 + $0x8] sm:$0xff]
  %v1054 = vld [vmem:[%s1051 + $0x10] sm:$0xff]
  %v1055 = vld [vmem:[%s1051 + $0x18] sm:$0xff]
  %v1056 = vperm.slane %v27, 6
  %v1058 = vsel %vm43, %v1049, 0
  %v1061 = vsel %vm43, %v1050, 0
  %1063 = vmatpush.msra.mxu0 0.0
  %1064 = vmatpush.msra.mxu0 0.0
  %1065 = vmatpush.msra.mxu0 0.0
  %1066 = vmatpush.msra.mxu0 0.0
  %1067 = vmatpush.msra.mxu0 0.0
  %1068 = vmatpush.msra.mxu0 0.0
  %1069 = vmatpush.msra.mxu0 0.0
  %1070 = vmatpush.msra.mxu0 0.0
  %1071 = vmatpush.msra.mxu0 0.0
  %1072 = vmatpush.msra.mxu0 0.0
  %1073 = vmatpush.msra.mxu0 0.0
  %1074 = vmatpush.msra.mxu0 0.0
  %1075 = vmatpush.msra.mxu0 %v1055
  %1076 = vmatpush.msra.mxu0 %v1054
  %1077 = vmatpush.msra.mxu0 %v1053
  %1078 = vmatpush.msra.mxu0 %v1052
  %1079 = vmatmul.f32.gmra.mxu0 %v1058
  %v1080 = vpop.f32.mrf.mxu0
  %v1081 = vadd.f32 %v1056, %v1080
  %1082 = vmatmul.f32.gmra.mxu0 %v1061
  %v1083 = vpop.f32.mrf.mxu0
  %v1084 = vadd.f32 %v1056, %v1083
  %1085 = vdwg.mxu0
  %v1086 = vmul.f32 %v1081, %v1081
  %v1087 = vmul.f32 %v1084, %v1084
  %v1088 = vmul.f32 %v1081, %v1086
  %v1089 = vmul.f32 %v1084, %v1087
  %v1090 = vmul.f32 %v1088, 0.044715
  %v1091 = vmul.f32 %v1089, 0.044715
  %v1092 = vadd.f32 %v1081, %v1090
  %v1093 = vadd.f32 %v1084, %v1091
  %v1094 = vmul.f32 %v1092, 0.7978846
  %v1095 = vmul.f32 %v1093, 0.7978846
  %v1096 = vtanh.pop %v1094
  %v1097 = vtanh.pop %v1095
  %v1098 = vadd.f32 %v1096, 1.0
  %v1099 = vadd.f32 %v1097, 1.0
  %v1100 = vmul.f32 %v1098, 0.5
  %v1101 = vmul.f32 %v1099, 0.5
  %v1102 = vmul.f32 %v1081, %v1100
  %v1103 = vmul.f32 %v1084, %v1101
  %s1104 = scalar_lea.vmem %s5, 64
  %v1105 = vld [vmem:[%s1104] sm:$0xff]
  %v1106 = vld [vmem:[%s1104 + $0x8] sm:$0xff]
  %v1107 = vld [vmem:[%s1104 + $0x10] sm:$0xff]
  %v1108 = vld [vmem:[%s1104 + $0x18] sm:$0xff]
  %v1109 = vld [vmem:[%s1104 + $0x20] sm:$0xff]
  %v1110 = vld [vmem:[%s1104 + $0x28] sm:$0xff]
  %v1111 = vld [vmem:[%s1104 + $0x30] sm:$0xff]
  %v1112 = vld [vmem:[%s1104 + $0x38] sm:$0xff]
  %v1113 = vperm.slane %v27, 7
  %v1115 = vsel %vm568, %v1102, 0
  %v1118 = vsel %vm568, %v1103, 0
  %1120 = vmatpush.msra.mxu0 0.0
  %1121 = vmatpush.msra.mxu0 0.0
  %1122 = vmatpush.msra.mxu0 0.0
  %1123 = vmatpush.msra.mxu0 0.0
  %1124 = vmatpush.msra.mxu0 0.0
  %1125 = vmatpush.msra.mxu0 0.0
  %1126 = vmatpush.msra.mxu0 0.0
  %1127 = vmatpush.msra.mxu0 0.0
  %1128 = vmatpush.msra.mxu0 %v1112
  %1129 = vmatpush.msra.mxu0 %v1111
  %1130 = vmatpush.msra.mxu0 %v1110
  %1131 = vmatpush.msra.mxu0 %v1109
  %1132 = vmatpush.msra.mxu0 %v1108
  %1133 = vmatpush.msra.mxu0 %v1107
  %1134 = vmatpush.msra.mxu0 %v1106
  %1135 = vmatpush.msra.mxu0 %v1105
  %1136 = vmatmul.f32.gmra.mxu0 %v1115
  %v1137 = vpop.f32.mrf.mxu0
  %v1138 = vadd.f32 %v1113, %v1137
  %1139 = vmatmul.f32.gmra.mxu0 %v1118
  %v1140 = vpop.f32.mrf.mxu0
  %v1141 = vadd.f32 %v1113, %v1140
  %1142 = vdwg.mxu0
  %v1143 = vadd.f32 %v1138, %v1049
  %v1144 = vadd.f32 %v1141, %v1050
  %v1145 = vsel %vm43, %v1143, 0.0
  %1146 = vadd.xlane.f32.xlu0 %v1145
  %v1147 = vpop.xlane.xlu0 %1146
  %v1148 = vsel %vm43, %v1144, 0.0
  %1149 = vadd.xlane.f32.xlu0 %v1148
  %v1150 = vpop.xlane.xlu0 %1149
  %v1151 = vmul.f32 %v1147, %v56
  %v1152 = vmul.f32 %v1150, %v56
  %v1153 = vsub.f32 %v1143, %v1151
  %v1154 = vsub.f32 %v1144, %v1152
  %v1155 = vmul.f32 %v1153, %v1153
  %v1156 = vmul.f32 %v1154, %v1154
  %v1157 = vsel %vm43, %v1155, 0.0
  %1158 = vadd.xlane.f32.xlu0 %v1157
  %v1159 = vpop.xlane.xlu0 %1158
  %v1160 = vsel %vm43, %v1156, 0.0
  %1161 = vadd.xlane.f32.xlu0 %v1160
  %v1162 = vpop.xlane.xlu0 %1161
  %v1163 = vmul.f32 %v1159, %v56
  %v1164 = vmul.f32 %v1162, %v56
  %v1165 = vadd.f32 %v1163, 1e-12
  %v1166 = vadd.f32 %v1164, 1e-12
  %v1167 = vrsqrt.pop %v1165
  %v1168 = vmul.f32 %v1167, %v1165
  %v1169 = vmul.f32 %v1168, %v1167
  %v1170 = vmul.f32 0.5, %v1169
  %v1171 = vsub.f32 1.5, %v1170
  %v1172 = vmul.f32 %v1167, %v1171
  %vm1173 = vweird.f32 %v1165
  %vm1174 = vweird.f32 %v1167
  %vm1175 = vmor %vm1173, %vm1174
  %v1176 = vsel %vm1175, %v1167, %v1172
  %v1177 = vrsqrt.pop %v1166
  %v1178 = vmul.f32 %v1177, %v1166
  %v1179 = vmul.f32 %v1178, %v1177
  %v1180 = vmul.f32 0.5, %v1179
  %v1181 = vsub.f32 1.5, %v1180
  %v1182 = vmul.f32 %v1177, %v1181
  %vm1183 = vweird.f32 %v1166
  %vm1184 = vweird.f32 %v1177
  %vm1185 = vmor %vm1183, %vm1184
  %v1186 = vsel %vm1185, %v1177, %v1182
  %v1187 = vmul.f32 %v1153, %v1176
  %v1188 = vmul.f32 %v1154, %v1186
  %v1189 = vperm.slane %v28, 0
  %v1190 = vmul.f32 %v1187, %v1189
  %v1191 = vmul.f32 %v1188, %v1189
  %v1192 = vperm.slane %v28, 1
  %v1193 = vadd.f32 %v1190, %v1192
  %v1194 = vadd.f32 %v1191, %v1192
  %v1195 = vperm.slane %v28, 3
  %v1197 = vsel %vm43, %v1193, 0
  %v1200 = vsel %vm43, %v1194, 0
  %1202 = vmatpush.msra.mxu0 0.0
  %1203 = vmatpush.msra.mxu0 0.0
  %1204 = vmatpush.msra.mxu0 0.0
  %1205 = vmatpush.msra.mxu0 0.0
  %1206 = vmatpush.msra.mxu0 0.0
  %1207 = vmatpush.msra.mxu0 0.0
  %1208 = vmatpush.msra.mxu0 0.0
  %1209 = vmatpush.msra.mxu0 0.0
  %1210 = vmatpush.msra.mxu0 0.0
  %1211 = vmatpush.msra.mxu0 0.0
  %1212 = vmatpush.msra.mxu0 0.0
  %1213 = vmatpush.msra.mxu0 0.0
  %1214 = vmatpush.msra.mxu0 %v32
  %1215 = vmatpush.msra.mxu0 %v31
  %1216 = vmatpush.msra.mxu0 %v30
  %1217 = vmatpush.msra.mxu0 %v29
  %1218 = vmatmul.f32.gmra.mxu0 %v1197
  %v1219 = vpop.f32.mrf.mxu0
  %v1220 = vadd.f32 %v1195, %v1219
  %1221 = vmatmul.f32.gmra.mxu0 %v1200
  %v1222 = vpop.f32.mrf.mxu0
  %v1223 = vadd.f32 %v1195, %v1222
  %1224 = vdwg.mxu0
  %v1225 = vperm.slane %v25, 0
  %v1226 = vlaneseq
  %v1227 = vshrl.u32 %v1226, 7
  %1229 = vset.pattern.permute.xlu0 %v1227
  %1230 = vperm.xlu0 %1229, %v1225
  %v1231 = vpop.permute.xlu0 %1230
  %v1232 = vperm.slane %v25, 1
  %v1233 = vlaneseq
  %v1234 = vshrl.u32 %v1233, 7
  %1236 = vset.pattern.permute.xlu0 %v1234
  %1237 = vperm.xlu0 %1236, %v1232
  %v1238 = vpop.permute.xlu0 %1237
  %v1239 = vadd.f32 %v1220, %v1231
  %v1240 = vadd.f32 %v1223, %v1238
  %vm1241 = vcmask 15360
  %v1242 = vsel %vm1241, %v1239, -inf
  %v1243 = vrot.slane %v1242, 4
  %v1244 = vmax.f32 %v1242, %v1243
  %v1245 = vrot.slane %v1244, 2
  %v1246 = vmax.f32 %v1244, %v1245
  %v1247 = vrot.slane %v1246, 1
  %v1248 = vmax.f32 %v1246, %v1247
  %v1249 = vsel %vm1241, %v1240, -inf
  %v1250 = vrot.slane %v1249, 4
  %v1251 = vmax.f32 %v1249, %v1250
  %v1252 = vrot.slane %v1251, 2
  %v1253 = vmax.f32 %v1251, %v1252
  %v1254 = vrot.slane %v1253, 1
  %v1255 = vmax.f32 %v1253, %v1254
  %v1256 = vsub.f32 %v1239, %v1248
  %v1257 = vsub.f32 %v1240, %v1255
  %v1258 = vmul.f32 %v1256, 1.442695
  %v1259 = vpow.pop %v1258
  %v1260 = vmul.f32 %v1257, 1.442695
  %v1261 = vpow.pop %v1260
  %v1262 = vsel %vm1241, %v1259, 0.0
  %v1263 = vrot.slane %v1262, 4
  %v1264 = vadd.f32 %v1262, %v1263
  %v1265 = vrot.slane %v1264, 2
  %v1266 = vadd.f32 %v1264, %v1265
  %v1267 = vrot.slane %v1266, 1
  %v1268 = vadd.f32 %v1266, %v1267
  %v1269 = vsel %vm1241, %v1261, 0.0
  %v1270 = vrot.slane %v1269, 4
  %v1271 = vadd.f32 %v1269, %v1270
  %v1272 = vrot.slane %v1271, 2
  %v1273 = vadd.f32 %v1271, %v1272
  %v1274 = vrot.slane %v1273, 1
  %v1275 = vadd.f32 %v1273, %v1274
  %v1276 = vrcp.pop %v1268
  %v1277 = vrcp.pop %v1275
  %v1278 = vmul.f32 %v1259, %v1276
  %v1279 = vmul.f32 %v1261, %v1277
  %1281 = vset.pattern.permute.xlu0 0
  %1282 = vperm.xlu0 %1281, %v1278
  %v1283 = vpop.permute.xlu0 %1282
  %1286 = vset.pattern.permute.xlu0 0
  %1287 = vperm.xlu0 %1286, %v1279
  %v1288 = vpop.permute.xlu0 %1287
  %v1290 = vmul.f32 %v1193, %v1283
  %v1291 = vmul.f32 %v1194, %v1288
  %v1292 = vsel %vm43, %v1290, 0.0
  %v1293 = vrot.slane %v1292, 4
  %v1294 = vadd.f32 %v1292, %v1293
  %v1295 = vrot.slane %v1294, 2
  %v1296 = vadd.f32 %v1294, %v1295
  %v1297 = vrot.slane %v1296, 1
  %v1298 = vadd.f32 %v1296, %v1297
  %v1299 = vsel %vm43, %v1291, 0.0
  %v1300 = vrot.slane %v1299, 4
  %v1301 = vadd.f32 %v1299, %v1300
  %v1302 = vrot.slane %v1301, 2
  %v1303 = vadd.f32 %v1301, %v1302
  %v1304 = vrot.slane %v1303, 1
  %v1305 = vadd.f32 %v1303, %v1304
  %1306 = vset.pattern.permute.xlu0 1
  %1307 = vperm.xlu0 %1306, %v1278
  %v1308 = vpop.permute.xlu0 %1307
  %1310 = vset.pattern.permute.xlu0 1
  %1311 = vperm.xlu0 %1310, %v1279
  %v1312 = vpop.permute.xlu0 %1311
  %v1314 = vmul.f32 %v1193, %v1308
  %v1315 = vmul.f32 %v1194, %v1312
  %v1316 = vsel %vm43, %v1314, 0.0
  %v1317 = vrot.slane %v1316, 4
  %v1318 = vadd.f32 %v1316, %v1317
  %v1319 = vrot.slane %v1318, 2
  %v1320 = vadd.f32 %v1318, %v1319
  %v1321 = vrot.slane %v1320, 1
  %v1322 = vadd.f32 %v1320, %v1321
  %v1323 = vsel %vm43, %v1315, 0.0
  %v1324 = vrot.slane %v1323, 4
  %v1325 = vadd.f32 %v1323, %v1324
  %v1326 = vrot.slane %v1325, 2
  %v1327 = vadd.f32 %v1325, %v1326
  %v1328 = vrot.slane %v1327, 1
  %v1329 = vadd.f32 %v1327, %v1328
  %vm1332 = vcmask 1041409
  %v1333 = vsel %vm1332, %v1305, %v1298
  %v1337 = vsel %vm1332, %v1329, %v1322
  %1338 = vrot.lane.b32.xlu0 %v1337, 32
  %v1339 = vpop.permute.xlu0 %1338
  %v1341 = vsel %vm43, %v1333, %v1339
  %v1342 = vmul.f32 %v1341, 0.125
  %v1343 = vperm.slane %v28, 2
  %v1345 = vsel %vm568, %v1342, 0
  %1347 = vmatpush.msra.mxu0 0.0
  %1348 = vmatpush.msra.mxu0 0.0
  %1349 = vmatpush.msra.mxu0 0.0
  %1350 = vmatpush.msra.mxu0 0.0
  %1351 = vmatpush.msra.mxu0 0.0
  %1352 = vmatpush.msra.mxu0 0.0
  %1353 = vmatpush.msra.mxu0 0.0
  %1354 = vmatpush.msra.mxu0 0.0
  %1355 = vmatpush.msra.mxu0 %v40
  %1356 = vmatpush.msra.mxu0 %v39
  %1357 = vmatpush.msra.mxu0 %v38
  %1358 = vmatpush.msra.mxu0 %v37
  %1359 = vmatpush.msra.mxu0 %v36
  %1360 = vmatpush.msra.mxu0 %v35
  %1361 = vmatpush.msra.mxu0 %v34
  %1362 = vmatpush.msra.mxu0 %v33
  %1363 = vmatmul.f32.gmra.mxu0 %v1345
  %v1364 = vpop.f32.mrf.mxu0
  %v1365 = vadd.f32 %v1343, %v1364
  %1366 = vdwg.mxu0
  %1367 = vst [vmem:[%s6] sm:$0x3] %v1365
  // Predicated region
  $region26: #{my_model7_forward.1} parent=0 // pred_check
    _
  $region27: #{my_model7_forward.1} parent=0 // pred_check_branch
    %1369 = sbr.rel (0) target = $region29
  $region28: #{my_model7_forward.1} parent=0 // pred_region
    _
  $region29: #{my_model7_forward.1} parent=0 // pred_fallthru
    _
  // Predicated region
  $region30: #{my_model7_forward.1} parent=0 // pred_check
    _
  $region31: #{my_model7_forward.1} parent=0 // pred_check_branch
    %1371 = sbr.rel (0) target = $region33
  $region32: #{my_model7_forward.1} parent=0 // pred_region
    _
  $region33: #{my_model7_forward.1} parent=0 // pred_fallthru
    _

</llo_original>
